<compile_context>
chip_gen: v6e
topology: v6e:2x2x1
jax: 0.10.0
libtpu: 0.0.40
codegen_flags: <defaults>
</compile_context>

<pallas_src>
import functools

import jax
import jax.numpy as jnp
from jax import lax
from jax.experimental import pallas as pl
from jax.experimental.pallas import tpu as pltpu


def _round_up(x, m):
    return ((x + m - 1) // m) * m


# --------------------------------------------------------------------------- kernel
def _fused_attention_kernel(adj_ref, feats_ref, w_ref, b_ref, out_ref,
                            m_sc, l_sc, acc_sc, zt_sc,
                            *, n_valid, f_out, tm, tk, mask_cols, bf16_matmul):
    i = pl.program_id(0)            # row-tile index  ("parallel")
    k = pl.program_id(1)            # col-tile index  ("arbitrary": online softmax)

    w = w_ref[...]                  # (F_in, F_pad)  resident
    b = b_ref[...]                  # (1,    F_pad)  resident

    # ---- per-row-tile init (first column tile): z_aug for these rows + reset state
    @pl.when(k == 0)
    def _():
        r0 = pl.multiple_of(i * tm, 8)
        feats_i = feats_ref[pl.ds(r0, tm), :]                       # (tm, F_in)
        zt_sc[...] = jnp.dot(feats_i, w, preferred_element_type=jnp.float32) + b
        m_sc[...] = jnp.full_like(m_sc, -1e30)
        l_sc[...] = jnp.zeros_like(l_sc)
        acc_sc[...] = jnp.zeros_like(acc_sc)

    zt = zt_sc[...]                                                 # (tm, F_pad)
    zi = zt[:, f_out:f_out + 1]       # folded sum(a_1 * z, axis=1)
    zj = zt[:, f_out + 1:f_out + 2]   # folded sum(a_2 * z, axis=1)

    # z_aug for this step's key/value columns (recomputed per step; K = F_in tiny).
    c0 = pl.multiple_of(k * tk, 8)
    feats_k = feats_ref[pl.ds(c0, tk), :]                           # (tk, F_in)
    zk = jnp.dot(feats_k, w, preferred_element_type=jnp.float32) + b  # (tk, F_pad)

    adj = adj_ref[...].astype(jnp.float32)                          # (tm, tk), 0/1
    row = i * tm + lax.broadcasted_iota(jnp.int32, (tm, tk), 0)
    col = k * tk + lax.broadcasted_iota(jnp.int32, (tm, tk), 1)

    # attention_A + attention_B: adj*zi everywhere, adj*zj on the diagonal only
    # (eye_matrix folded into the row==col mask).
    s = adj * (zi + jnp.where(row == col, zj, 0.0))
    s = jnp.where(s >= 0, s, 0.01 * s)                              # LeakyReLU(0.01)
    if mask_cols:                                                   # static flag
        s = jnp.where(col < n_valid, s, -1e30)                      # padded columns

    # ---- online (flash-style) softmax update; all state kept in f32.
    m_prev = m_sc[...]
    m_new = jnp.maximum(m_prev, jnp.max(s, axis=1, keepdims=True))
    alpha = jnp.exp(m_prev - m_new)
    p = jnp.exp(s - m_new)
    l_sc[...] = alpha * l_sc[...] + jnp.sum(p, axis=1, keepdims=True)
    if bf16_matmul:     # bf16-native MXU on v6e/v7x, f32 accumulate
        pv = jnp.dot(p.astype(jnp.bfloat16), zk.astype(jnp.bfloat16),
                     preferred_element_type=jnp.float32)
    else:
        pv = jnp.dot(p, zk, preferred_element_type=jnp.float32)
    acc_sc[...] = alpha * acc_sc[...] + pv
    m_sc[...] = m_new

    # ---- finalize on the last column tile: h = z - softmax(att) @ z, then ReLU.
    @pl.when(k == pl.num_programs(1) - 1)
    def _():
        inv_l = 1.0 / l_sc[...]                   # exact divide ((tm,1) only)
        h = zt_sc[...] - acc_sc[...] * inv_l
        out_ref[...] = jnp.maximum(h, 0.0).astype(out_ref.dtype)


# --------------------------------------------------------------------------- wrapper
def model_base_forward(adj_matrix, eye_matrix, subgraph_feats, node_mask,
                       weight, bias, a_1, a_2, *,
                       tm=256, tk=512, bf16_matmul=True, bf16_adj=True):
    """Pallas forward.  Returns relu(h)[node_mask], matching the PyTorch module.

    `eye_matrix` is accepted for API parity but never read: its only effect in the
    reference is selecting the diagonal, which is rebuilt in-kernel.
    `bf16_adj=True` assumes a 0/1 adjacency (exact in bf16); set False for weights.
    """
    del eye_matrix  # folded into the in-kernel diagonal mask

    N, F_in = subgraph_feats.shape
    F_out = weight.shape[1]
    F_pad = _round_up(F_out + 2, 128)             # lane-dense z_aug / output width

    # Tile sizes: tm multiple of 16 (bf16 adj sublanes), tk multiple of 128 (lanes).
    tm = _round_up(max(16, min(tm, _round_up(N, 16))), 16)
    tk = _round_up(max(128, min(tk, _round_up(N, 128))), 128)

    n_pad_r = _round_up(N, tm)
    n_pad_c = _round_up(N, tk)
    n_pad_max = max(n_pad_r, n_pad_c)
    n_row_tiles = n_pad_r // tm
    n_col_tiles = n_pad_c // tk

    # ---- fold zi/zj into the linear layer: columns F_out (a_1) and F_out+1 (a_2)
    w = weight.astype(jnp.float32)
    b = bias.reshape(1, F_out).astype(jnp.float32)
    a1 = a_1.reshape(1, F_out).astype(jnp.float32)
    a2 = a_2.reshape(1, F_out).astype(jnp.float32)

    w_aug = jnp.zeros((F_in, F_pad), jnp.float32)
    w_aug = w_aug.at[:, :F_out].set(w)
    w_aug = w_aug.at[:, F_out].set((w @ a1.T)[:, 0])
    w_aug = w_aug.at[:, F_out + 1].set((w @ a2.T)[:, 0])

    b_aug = jnp.zeros((1, F_pad), jnp.float32)
    b_aug = b_aug.at[:, :F_out].set(b)
    b_aug = b_aug.at[:, F_out].set(jnp.sum(b * a1))
    b_aug = b_aug.at[:, F_out + 1].set(jnp.sum(b * a2))

    feats = jnp.pad(subgraph_feats.astype(jnp.float32), ((0, n_pad_max - N), (0, 0)))
    adj_dtype = jnp.bfloat16 if bf16_adj else jnp.float32
    adj = jnp.pad(adj_matrix, ((0, n_pad_r - N), (0, n_pad_c - N))).astype(adj_dtype)

    # ---- explicit VMEM budget (double-buffered streams + scratch + f32 temporaries)
    adj_b = 2 if bf16_adj else 4
    est = (2 * tm * tk * adj_b                      # adj tiles (double-buffered)
           + 2 * n_pad_max * max(F_in, 128) * 4     # resident feats (lane-padded)
           + 2 * F_in * F_pad * 4 + 2 * 8 * F_pad * 4   # W_aug, b_aug
           + 2 * tm * F_pad * 4                     # output tiles
           + 2 * tm * 128 * 4 + 2 * tm * F_pad * 4  # m/l + acc/zt scratch
           + 8 * tm * tk * 4)                       # in-kernel f32 temporaries
    vmem_limit = int(min(64 * 1024 * 1024, max(32 * 1024 * 1024, 2 * est)))

    kern = functools.partial(
        _fused_attention_kernel, n_valid=N, f_out=F_out, tm=tm, tk=tk,
        mask_cols=(n_pad_c != N), bf16_matmul=bf16_matmul)

    h = pl.pallas_call(
        kern,
        out_shape=jax.ShapeDtypeStruct((n_pad_r, F_pad), jnp.float32),
        grid=(n_row_tiles, n_col_tiles),
        in_specs=[
            pl.BlockSpec((tm, tk), lambda i, k: (i, k)),            # adj tile
            pl.BlockSpec((n_pad_max, F_in), lambda i, k: (0, 0)),   # feats (resident)
            pl.BlockSpec((F_in, F_pad), lambda i, k: (0, 0)),       # W_aug (resident)
            pl.BlockSpec((1, F_pad), lambda i, k: (0, 0)),          # b_aug (resident)
        ],
        out_specs=pl.BlockSpec((tm, F_pad), lambda i, k: (i, 0)),   # revisited over k
        scratch_shapes=[
            pltpu.VMEM((tm, 1), jnp.float32),      # running row max
            pltpu.VMEM((tm, 1), jnp.float32),      # running denominator
            pltpu.VMEM((tm, F_pad), jnp.float32),  # attention @ z accumulator
            pltpu.VMEM((tm, F_pad), jnp.float32),  # z_aug for this row tile
        ],
        compiler_params=pltpu.CompilerParams(
            dimension_semantics=("parallel", "arbitrary"),
            vmem_limit_bytes=vmem_limit),
    )(adj, feats, w_aug, b_aug)

    # Dynamic-shape boolean row selection (h[node_mask]) stays in plain JAX glue.
    return h[:N, :F_out][node_mask]


# --------------------------------------------------------------------------- reference
def _reference_forward(adj, eye, feats, mask, W, b, a1, a2):
    z = feats @ W + b
    zi = jnp.sum(a1 * z, axis=1, keepdims=True)
    zj = jnp.sum(a2 * z, axis=1, keepdims=True)
    att = adj * zi + adj * (eye * zj)
    att = jnp.where(att >= 0, att, 0.01 * att)
    att = jax.nn.softmax(att, axis=1)
    h = z - att @ z
    return jax.nn.relu(h)[mask]


if __name__ == "__main__":
    key = jax.random.PRNGKey(0)
    # N chosen so the demo exercises row tiling (tm=128 -> 2 row tiles), column
    # tiling with online softmax (tk=128 -> 2 col tiles) and the padded-column
    # masking path (N_pad_c = 256 > N = 200).
    N, in_feats, out_feats = 200, 16, 8

    k = jax.random.split(key, 7)

    bound = 1.0 / jnp.sqrt(in_feats)
    weight = jax.random.uniform(k[0], (in_feats, out_feats), jnp.float32, -bound, bound)
    bias = jax.random.uniform(k[1], (out_feats,), jnp.float32, -bound, bound)
    a_1 = jax.random.uniform(k[2], (1, out_feats), jnp.float32)
    a_2 = jax.random.uniform(k[3], (1, out_feats), jnp.float32)

    feats = jax.random.normal(k[4], (N, in_feats), jnp.float32)
    adj_raw = (jax.random.uniform(k[5], (N, N)) < 0.1).astype(jnp.float32)
    adj_matrix = jnp.clip(adj_raw + adj_raw.T + jnp.eye(N, dtype=jnp.float32), 0.0, 1.0)
    eye_matrix = jnp.eye(N, dtype=jnp.float32)
    node_mask = jax.random.uniform(k[6], (N,)) < 0.5

    out = model_base_forward(adj_matrix, eye_matrix, feats, node_mask,
                             weight, bias, a_1, a_2, tm=128, tk=128)
    out = jax.block_until_ready(out)

    ref = _reference_forward(adj_matrix, eye_matrix, feats, node_mask,
                             weight, bias.reshape(1, -1), a_1, a_2)

    assert out.shape == ref.shape
    # Tolerance reflects the bf16 MXU operands of the (attention @ z) matmul
    # (softmax reductions and accumulation are f32, division is exact).
    assert jnp.allclose(out, ref, atol=2e-2, rtol=2e-2), (
        float(jnp.max(jnp.abs(out - ref))))

    print("KERNEL_OK")
</pallas_src>

<mosaic_0001>
module attributes {stable_mosaic.version = 11 : i64} {
  func.func @_fused_attention_kernel(%arg0: i32, %arg1: i32, %arg2: memref<128x128xbf16, #tpu.memory_space<vmem>>, %arg3: memref<256x16xf32, #tpu.memory_space<vmem>>, %arg4: memref<16x128xf32, #tpu.memory_space<vmem>>, %arg5: memref<1x128xf32, #tpu.memory_space<vmem>>, %arg6: memref<128x128xf32, #tpu.memory_space<vmem>>, %arg7: memref<128x1xf32, #tpu.memory_space<vmem>>, %arg8: memref<128x1xf32, #tpu.memory_space<vmem>>, %arg9: memref<128x128xf32, #tpu.memory_space<vmem>>, %arg10: memref<128x128xf32, #tpu.memory_space<vmem>>) attributes {dimension_semantics = [#tpu.dimension_semantics<parallel>, #tpu.dimension_semantics<arbitrary>], iteration_bounds = array<i64: 2, 2>, scalar_prefetch = 0 : i64, scratch_operands = 4 : i64, tpu.core_type = #tpu.core_type<tc>, window_params = [{transform_indices = @transform_0, window_bounds = array<i64: 128, 128>}, {pipeline_mode = #tpu.pipeline_mode<synchronous>, transform_indices = @transform_1, window_bounds = array<i64: 256, 16>}, {pipeline_mode = #tpu.pipeline_mode<synchronous>, transform_indices = @transform_2, window_bounds = array<i64: 16, 128>}, {pipeline_mode = #tpu.pipeline_mode<synchronous>, transform_indices = @transform_3, window_bounds = array<i64: 1, 128>}, {transform_indices = @transform_4, window_bounds = array<i64: 128, 128>}]} {
    %c0 = arith.constant 0 : index
    %c0_0 = arith.constant 0 : index
    %0 = vector.load %arg4[%c0, %c0_0] : memref<16x128xf32, #tpu.memory_space<vmem>>, vector<16x128xf32>
    %c0_1 = arith.constant 0 : index
    %c0_2 = arith.constant 0 : index
    %1 = vector.load %arg5[%c0_1, %c0_2] : memref<1x128xf32, #tpu.memory_space<vmem>>, vector<1x128xf32>
    %c0_i32 = arith.constant 0 : i32
    %2 = arith.cmpi eq, %arg1, %c0_i32 : i32
    %3 = arith.extui %2 : i1 to i32
    %c0_i32_3 = arith.constant 0 : i32
    %4 = arith.cmpi ne, %3, %c0_i32_3 : i32
    scf.if %4 {
      %c128_i32_31 = arith.constant 128 : i32
      %69 = arith.muli %arg0, %c128_i32_31 : i32
      %70 = tpu.assume_multiple %69, 8 : i32
      %71 = arith.index_cast %70 : i32 to index
      %c0_32 = arith.constant 0 : index
      %72 = vector.load %arg3[%71, %c0_32] : memref<256x16xf32, #tpu.memory_space<vmem>>, vector<128x16xf32>
      %cst_33 = arith.constant dense<0.000000e+00> : vector<128x128xf32>
      %73 = tpu.matmul %72, %0, %cst_33 {dimension_numbers = #tpu.dot_dimension_numbers<[1], [0], [0], [1], [0, 0, 1, 1], [], []>} : vector<128x16xf32>, vector<16x128xf32>, vector<128x128xf32> -> vector<128x128xf32>
      %74 = vector.broadcast %1 : vector<1x128xf32> to vector<128x128xf32>
      %75 = arith.addf %73, %74 : vector<128x128xf32>
      %c0_34 = arith.constant 0 : index
      %c0_35 = arith.constant 0 : index
      %76 = vector.load %arg10[%c0_34, %c0_35] : memref<128x128xf32, #tpu.memory_space<vmem>>, vector<128x128xf32>
      tpu.vector_store %arg10[%c0_34, %c0_35], %75 {strides = array<i32>} : memref<128x128xf32, #tpu.memory_space<vmem>>, vector<128x128xf32>,
      %cst_36 = arith.constant -1.000000e+30 : f32
      %77 = vector.broadcast %cst_36 : f32 to vector<128x1xf32>
      %c0_37 = arith.constant 0 : index
      %c0_38 = arith.constant 0 : index
      %78 = vector.load %arg7[%c0_37, %c0_38] : memref<128x1xf32, #tpu.memory_space<vmem>>, vector<128x1xf32>
      tpu.vector_store %arg7[%c0_37, %c0_38], %77 {strides = array<i32>} : memref<128x1xf32, #tpu.memory_space<vmem>>, vector<128x1xf32>,
      %cst_39 = arith.constant 0.000000e+00 : f32
      %79 = vector.broadcast %cst_39 : f32 to vector<128x1xf32>
      %c0_40 = arith.constant 0 : index
      %c0_41 = arith.constant 0 : index
      %80 = vector.load %arg8[%c0_40, %c0_41] : memref<128x1xf32, #tpu.memory_space<vmem>>, vector<128x1xf32>
      tpu.vector_store %arg8[%c0_40, %c0_41], %79 {strides = array<i32>} : memref<128x1xf32, #tpu.memory_space<vmem>>, vector<128x1xf32>,
      %cst_42 = arith.constant 0.000000e+00 : f32
      %81 = vector.broadcast %cst_42 : f32 to vector<128x128xf32>
      %c0_43 = arith.constant 0 : index
      %c0_44 = arith.constant 0 : index
      %82 = vector.load %arg9[%c0_43, %c0_44] : memref<128x128xf32, #tpu.memory_space<vmem>>, vector<128x128xf32>
      tpu.vector_store %arg9[%c0_43, %c0_44], %81 {strides = array<i32>} : memref<128x128xf32, #tpu.memory_space<vmem>>, vector<128x128xf32>,
    } else {
    }
    %c0_4 = arith.constant 0 : index
    %c0_5 = arith.constant 0 : index
    %5 = vector.load %arg10[%c0_4, %c0_5] : memref<128x128xf32, #tpu.memory_space<vmem>>, vector<128x128xf32>
    %6 = vector.extract_strided_slice %5 {offsets = [0, 8], sizes = [128, 1], strides = [1, 1]} : vector<128x128xf32> to vector<128x1xf32>
    %7 = vector.extract_strided_slice %5 {offsets = [0, 9], sizes = [128, 1], strides = [1, 1]} : vector<128x128xf32> to vector<128x1xf32>
    %c128_i32 = arith.constant 128 : i32
    %8 = arith.muli %arg1, %c128_i32 : i32
    %9 = tpu.assume_multiple %8, 8 : i32
    %10 = arith.index_cast %9 : i32 to index
    %c0_6 = arith.constant 0 : index
    %11 = vector.load %arg3[%10, %c0_6] : memref<256x16xf32, #tpu.memory_space<vmem>>, vector<128x16xf32>
    %cst = arith.constant dense<0.000000e+00> : vector<128x128xf32>
    %12 = tpu.matmul %11, %0, %cst {dimension_numbers = #tpu.dot_dimension_numbers<[1], [0], [0], [1], [0, 0, 1, 1], [], []>} : vector<128x16xf32>, vector<16x128xf32>, vector<128x128xf32> -> vector<128x128xf32>
    %13 = vector.broadcast %1 : vector<1x128xf32> to vector<128x128xf32>
    %14 = arith.addf %12, %13 : vector<128x128xf32>
    %c0_7 = arith.constant 0 : index
    %c0_8 = arith.constant 0 : index
    %15 = vector.load %arg2[%c0_7, %c0_8] : memref<128x128xbf16, #tpu.memory_space<vmem>>, vector<128x128xbf16>
    %16 = arith.extf %15 : vector<128x128xbf16> to vector<128x128xf32>
    %c128_i32_9 = arith.constant 128 : i32
    %17 = arith.muli %arg0, %c128_i32_9 : i32
    %18 = tpu.iota {dimensions = array<i32: 0>} : vector<128x128xi32>
    %19 = vector.broadcast %17 : i32 to vector<128x128xi32>
    %20 = arith.addi %19, %18 : vector<128x128xi32>
    %c128_i32_10 = arith.constant 128 : i32
    %21 = arith.muli %arg1, %c128_i32_10 : i32
    %22 = tpu.iota {dimensions = array<i32: 1>} : vector<128x128xi32>
    %23 = vector.broadcast %21 : i32 to vector<128x128xi32>
    %24 = arith.addi %23, %22 : vector<128x128xi32>
    %25 = arith.cmpi eq, %20, %24 : vector<128x128xi32>
    %cst_11 = arith.constant 0.000000e+00 : f32
    %26 = vector.shape_cast %7 : vector<128x1xf32> to vector<128x1xf32>
    %27 = vector.broadcast %26 : vector<128x1xf32> to vector<128x128xf32>
    %28 = vector.broadcast %cst_11 : f32 to vector<128x128xf32>
    %29 = arith.select %25, %27, %28 : vector<128x128xi1>, vector<128x128xf32>
    %30 = vector.broadcast %6 : vector<128x1xf32> to vector<128x128xf32>
    %31 = arith.addf %30, %29 : vector<128x128xf32>
    %32 = arith.mulf %16, %31 : vector<128x128xf32>
    %cst_12 = arith.constant 0.000000e+00 : f32
    %33 = vector.broadcast %cst_12 : f32 to vector<128x128xf32>
    %34 = arith.cmpf oge, %32, %33 : vector<128x128xf32>
    %cst_13 = arith.constant 0.00999999977 : f32
    %35 = vector.broadcast %cst_13 : f32 to vector<128x128xf32>
    %36 = arith.mulf %35, %32 : vector<128x128xf32>
    %37 = arith.select %34, %32, %36 : vector<128x128xi1>, vector<128x128xf32>
    %c200_i32 = arith.constant 200 : i32
    %38 = vector.broadcast %c200_i32 : i32 to vector<128x128xi32>
    %39 = arith.cmpi slt, %24, %38 : vector<128x128xi32>
    %cst_14 = arith.constant -1.000000e+30 : f32
    %40 = vector.broadcast %cst_14 : f32 to vector<128x128xf32>
    %41 = arith.select %39, %37, %40 : vector<128x128xi1>, vector<128x128xf32>
    %c0_15 = arith.constant 0 : index
    %c0_16 = arith.constant 0 : index
    %42 = vector.load %arg7[%c0_15, %c0_16] : memref<128x1xf32, #tpu.memory_space<vmem>>, vector<128x1xf32>
    %cst_17 = arith.constant dense<0xFF800000> : vector<128xf32>
    %43 = vector.multi_reduction <maximumf>, %41, %cst_17 [1] : vector<128x128xf32> to vector<128xf32>
    %44 = vector.shape_cast %43 : vector<128xf32> to vector<128x1xf32>
    %45 = arith.maximumf %42, %44 : vector<128x1xf32>
    %46 = arith.subf %42, %45 : vector<128x1xf32>
    %47 = math.exp %46 : vector<128x1xf32>
    %48 = vector.broadcast %45 : vector<128x1xf32> to vector<128x128xf32>
    %49 = arith.subf %41, %48 : vector<128x128xf32>
    %50 = math.exp %49 : vector<128x128xf32>
    %c0_18 = arith.constant 0 : index
    %c0_19 = arith.constant 0 : index
    %51 = vector.load %arg8[%c0_18, %c0_19] : memref<128x1xf32, #tpu.memory_space<vmem>>, vector<128x1xf32>
    %52 = arith.mulf %47, %51 : vector<128x1xf32>
    %cst_20 = arith.constant dense<0.000000e+00> : vector<128xf32>
    %53 = vector.multi_reduction <add>, %50, %cst_20 [1] : vector<128x128xf32> to vector<128xf32>
    %54 = vector.shape_cast %53 : vector<128xf32> to vector<128x1xf32>
    %55 = arith.addf %52, %54 : vector<128x1xf32>
    %c0_21 = arith.constant 0 : index
    %c0_22 = arith.constant 0 : index
    %56 = vector.load %arg8[%c0_21, %c0_22] : memref<128x1xf32, #tpu.memory_space<vmem>>, vector<128x1xf32>
    tpu.vector_store %arg8[%c0_21, %c0_22], %55 {strides = array<i32>} : memref<128x1xf32, #tpu.memory_space<vmem>>, vector<128x1xf32>,
    %57 = arith.truncf %50 : vector<128x128xf32> to vector<128x128xbf16>
    %58 = arith.truncf %14 : vector<128x128xf32> to vector<128x128xbf16>
    %cst_23 = arith.constant dense<0.000000e+00> : vector<128x128xf32>
    %59 = tpu.matmul %57, %58, %cst_23 {dimension_numbers = #tpu.dot_dimension_numbers<[1], [0], [0], [1], [0, 0, 1, 1], [], []>} : vector<128x128xbf16>, vector<128x128xbf16>, vector<128x128xf32> -> vector<128x128xf32>
    %c0_24 = arith.constant 0 : index
    %c0_25 = arith.constant 0 : index
    %60 = vector.load %arg9[%c0_24, %c0_25] : memref<128x128xf32, #tpu.memory_space<vmem>>, vector<128x128xf32>
    %61 = vector.broadcast %47 : vector<128x1xf32> to vector<128x128xf32>
    %62 = arith.mulf %61, %60 : vector<128x128xf32>
    %63 = arith.addf %62, %59 : vector<128x128xf32>
    %c0_26 = arith.constant 0 : index
    %c0_27 = arith.constant 0 : index
    %64 = vector.load %arg9[%c0_26, %c0_27] : memref<128x128xf32, #tpu.memory_space<vmem>>, vector<128x128xf32>
    tpu.vector_store %arg9[%c0_26, %c0_27], %63 {strides = array<i32>} : memref<128x128xf32, #tpu.memory_space<vmem>>, vector<128x128xf32>,
    %c0_28 = arith.constant 0 : index
    %c0_29 = arith.constant 0 : index
    %65 = vector.load %arg7[%c0_28, %c0_29] : memref<128x1xf32, #tpu.memory_space<vmem>>, vector<128x1xf32>
    tpu.vector_store %arg7[%c0_28, %c0_29], %45 {strides = array<i32>} : memref<128x1xf32, #tpu.memory_space<vmem>>, vector<128x1xf32>,
    %c1_i32 = arith.constant 1 : i32
    %66 = arith.cmpi eq, %arg1, %c1_i32 : i32
    %67 = arith.extui %66 : i1 to i32
    %c0_i32_30 = arith.constant 0 : i32
    %68 = arith.cmpi ne, %67, %c0_i32_30 : i32
    scf.if %68 {
      %c0_31 = arith.constant 0 : index
      %c0_32 = arith.constant 0 : index
      %69 = vector.load %arg8[%c0_31, %c0_32] : memref<128x1xf32, #tpu.memory_space<vmem>>, vector<128x1xf32>
      %cst_33 = arith.constant 1.000000e+00 : f32
      %70 = vector.broadcast %cst_33 : f32 to vector<128x1xf32>
      %71 = arith.divf %70, %69 : vector<128x1xf32>
      %c0_34 = arith.constant 0 : index
      %c0_35 = arith.constant 0 : index
      %72 = vector.load %arg10[%c0_34, %c0_35] : memref<128x128xf32, #tpu.memory_space<vmem>>, vector<128x128xf32>
      %c0_36 = arith.constant 0 : index
      %c0_37 = arith.constant 0 : index
      %73 = vector.load %arg9[%c0_36, %c0_37] : memref<128x128xf32, #tpu.memory_space<vmem>>, vector<128x128xf32>
      %74 = vector.broadcast %71 : vector<128x1xf32> to vector<128x128xf32>
      %75 = arith.mulf %73, %74 : vector<128x128xf32>
      %76 = arith.subf %72, %75 : vector<128x128xf32>
      %cst_38 = arith.constant 0.000000e+00 : f32
      %77 = vector.broadcast %cst_38 : f32 to vector<128x128xf32>
      %78 = arith.maximumf %76, %77 : vector<128x128xf32>
      %c0_39 = arith.constant 0 : index
      %c0_40 = arith.constant 0 : index
      %79 = vector.load %arg6[%c0_39, %c0_40] : memref<128x128xf32, #tpu.memory_space<vmem>>, vector<128x128xf32>
      tpu.vector_store %arg6[%c0_39, %c0_40], %78 {strides = array<i32>} : memref<128x128xf32, #tpu.memory_space<vmem>>, vector<128x128xf32>,
    } else {
    }
    return
  }
  func.func @transform_0(%arg0: i32, %arg1: i32) -> (i32, i32) {
    %c0_i32 = arith.constant 0 : i32
    return %arg0, %arg1 : i32, i32
  }
  func.func @transform_1(%arg0: i32, %arg1: i32) -> (i32, i32) {
    %c0_i32 = arith.constant 0 : i32
    %c0_i32_0 = arith.constant 0 : i32
    %c0_i32_1 = arith.constant 0 : i32
    return %c0_i32, %c0_i32_0 : i32, i32
  }
  func.func @transform_2(%arg0: i32, %arg1: i32) -> (i32, i32) {
    %c0_i32 = arith.constant 0 : i32
    %c0_i32_0 = arith.constant 0 : i32
    %c0_i32_1 = arith.constant 0 : i32
    return %c0_i32, %c0_i32_0 : i32, i32
  }
  func.func @transform_3(%arg0: i32, %arg1: i32) -> (i32, i32) {
    %c0_i32 = arith.constant 0 : i32
    %c0_i32_0 = arith.constant 0 : i32
    %c0_i32_1 = arith.constant 0 : i32
    return %c0_i32, %c0_i32_0 : i32, i32
  }
  func.func @transform_4(%arg0: i32, %arg1: i32) -> (i32, i32) {
    %c0_i32 = arith.constant 0 : i32
    %c0_i32_0 = arith.constant 0 : i32
    return %arg0, %c0_i32 : i32, i32
  }
}

</mosaic_0001>

<llo_original>
// kernel: tpu_custom_call.1
$region0: #{tpu_custom_call.1}
  #allocation0 [shape = 'u32[]', space=smem, size = 0x4, offset = 0x4, fixed_abs, tag = 'smem constant byte address 0x4 - core index']
  #allocation1 [shape = 'u32[144,128]{1,0:T(1,128)}', space=vmem, size = 0x12000, scoped, tag = 'internal scratch']
  #allocation2 [shape = 'f32[128,1]{1,0:T(8,128)}', space=vmem, size = 0x10000, scoped, tag = 'scratch operand']
  #allocation3 [shape = 'f32[128,1]{1,0:T(8,128)}', space=vmem, size = 0x10000, scoped, tag = 'scratch operand']
  #allocation4 [shape = 'f32[128,128]{1,0:T(8,128)}', space=vmem, size = 0x10000, scoped, tag = 'scratch operand']
  #allocation5 [shape = 'f32[128,128]{1,0:T(8,128)}', space=vmem, size = 0x10000, scoped, tag = 'scratch operand']
  %s0 = inlined_call_operand.vmem [shape: bf16[256,256], index: 0, kind: input, shape index: {}]
  %s1 = inlined_call_operand.vmem [shape: f32[256,16], index: 1, kind: input, shape index: {}]
  %s2 = inlined_call_operand.vmem [shape: f32[16,128], index: 2, kind: input, shape index: {}]
  %s3 = inlined_call_operand.vmem [shape: f32[1,128], index: 3, kind: input, shape index: {}]
  %s4 = inlined_call_operand.hbm [shape: f32[256,128], index: 4, kind: output, shape index: {}]
  %s5 = sld [smem:[#allocation0]]
  $region98: #{tpu_custom_call.1} parent=0
    _
  %s7 = ssub.s32 1, %s5
  %s8 = scalar_select 0, %s7, %s5
  $region1: #{tpu_custom_call.1} parent=0
    #allocation6 [shape = 'u8[65536]{0}', space=vmem, size = 0x10000, scoped, tag = 'input window, operand 0']
    #allocation7 [shape = 'u8[131072]{0}', space=vmem, size = 0x20000, scoped, tag = 'output window, operand 0']
    #allocation8 [shape = 's32[2]{0}', space=sflag, size = 0x8, scoped, tag = 'scoped memory for tpu_custom_call.1']
    %9 = vsyncpa [#allocation8], 0
    %s10 = scalar_lea.sflag [#allocation8], 1
    %11 = vsyncpa %s10, 0
    loop: start=0, step=1, limit=6
    $region2: #{tpu_custom_call.1} parent=1 // loop_pre_header
      _
    $region3: #{tpu_custom_call.1} parent=1 // loop_header
      %s13 = sphi 0, %s17
      %p14 = scmp.ge.s32.totalorder %s13, 6
      %s20 = sphi 0, %s32
      %s21 = sphi 0, %s28
      %s22 = sphi 0, %s20
      %s23 = sphi 0, %s21
      %s24 = sphi 0, %s22
      %s25 = sphi 0, %s23
      %s37 = sphi 0, %s39
      %s40 = sphi 0, %s37
      %s41 = sphi 0, %s40
      %s57 = sphi 0, %s41
      %s61 = sphi 0, %s61
      %s63 = sphi 0, %s61
      %s64 = sphi 0, %s63
      %s78 = sphi 0, %s64
      %s82 = sphi 0, %s82
      %s84 = sphi 0, %s82
      %s85 = sphi 0, %s84
      %s99 = sphi 0, %s85
      %s103 = sphi 0, %s103
      %s105 = sphi 0, %s103
      %s106 = sphi 0, %s105
      %s120 = sphi 0, %s106
      %s126 = sphi 0, %s128
      %s129 = sphi 0, %s126
      %s130 = sphi 0, %s129
      %s146 = sphi 0, %s130
    $region4: #{tpu_custom_call.1} parent=1 // loop_header_branch
      %16 = sbr.rel (%p14) target = $region8
    $region5: #{tpu_custom_call.1} parent=1 // loop_body
      %s18 = ssub.s32 %s13, 1
      %s19 = ssub.s32 %s13, 2
      %s26 = sadd.s32 1, %s21
      %p27 = scmp.ge.s32.totalorder %s26, 2
      %s28 = scalar_select %p27, 0, %s26
      %s29 = sadd.s32 1, %s20
      %s30 = scalar_select %p27, %s29, %s20
      %p31 = scmp.ge.s32.totalorder %s30, 2
      %s32 = scalar_select %p31, 0, %s30
      %s33 = ssub.s32 %s20, %s32
      %s34 = ssub.s32 %s21, %s28
      %s35 = sor.u32 %s33, %s34
      %p36 = scmp.eq.s32.totalorder %s35, 0
      %s38 = sadd.s32 %s37, 1
      %s39 = scalar_select %p36, %s37, %s38
      %p42 = pneg %p36
      %p43 = scmp.eq.s32.totalorder %s13, 3
      %p44 = por %p42, %p43
      %p45 = scmp.ne.s32.totalorder %s37, %s40
      %p46 = scmp.eq.s32.totalorder %s13, 0
      %p47 = por %p45, %p46
      %p48 = scmp.ne.s32.totalorder %s37, %s40
      %p49 = scmp.eq.s32.totalorder %s18, 3
      %p50 = por %p48, %p49
      %p51 = scmp.ne.s32.totalorder %s40, %s41
      %p52 = scmp.eq.s32.totalorder %s18, 0
      %p53 = por %p51, %p52
      %p54 = scmp.ne.s32.totalorder %s40, %s41
      %p55 = scmp.eq.s32.totalorder %s19, 3
      %p56 = por %p54, %p55
      %p58 = scmp.ne.s32.totalorder %s41, %s57
      %p59 = scmp.eq.s32.totalorder %s19, 0
      %p60 = por %p58, %p59
      %s62 = sadd.s32 %s61, 1
      %p65 = scmp.eq.s32.totalorder %s13, 3
      %p66 = scmp.ne.s32.totalorder %s61, %s63
      %p67 = scmp.eq.s32.totalorder %s13, 0
      %p68 = por %p66, %p67
      %p69 = scmp.ne.s32.totalorder %s61, %s63
      %p70 = scmp.eq.s32.totalorder %s18, 3
      %p71 = por %p69, %p70
      %p72 = scmp.ne.s32.totalorder %s63, %s64
      %p73 = scmp.eq.s32.totalorder %s18, 0
      %p74 = por %p72, %p73
      %p75 = scmp.ne.s32.totalorder %s63, %s64
      %p76 = scmp.eq.s32.totalorder %s19, 3
      %p77 = por %p75, %p76
      %p79 = scmp.ne.s32.totalorder %s64, %s78
      %p80 = scmp.eq.s32.totalorder %s19, 0
      %p81 = por %p79, %p80
      %s83 = sadd.s32 %s82, 1
      %p86 = scmp.eq.s32.totalorder %s13, 3
      %p87 = scmp.ne.s32.totalorder %s82, %s84
      %p88 = scmp.eq.s32.totalorder %s13, 0
      %p89 = por %p87, %p88
      %p90 = scmp.ne.s32.totalorder %s82, %s84
      %p91 = scmp.eq.s32.totalorder %s18, 3
      %p92 = por %p90, %p91
      %p93 = scmp.ne.s32.totalorder %s84, %s85
      %p94 = scmp.eq.s32.totalorder %s18, 0
      %p95 = por %p93, %p94
      %p96 = scmp.ne.s32.totalorder %s84, %s85
      %p97 = scmp.eq.s32.totalorder %s19, 3
      %p98 = por %p96, %p97
      %p100 = scmp.ne.s32.totalorder %s85, %s99
      %p101 = scmp.eq.s32.totalorder %s19, 0
      %p102 = por %p100, %p101
      %s104 = sadd.s32 %s103, 1
      %p107 = scmp.eq.s32.totalorder %s13, 3
      %p108 = scmp.ne.s32.totalorder %s103, %s105
      %p109 = scmp.eq.s32.totalorder %s13, 0
      %p110 = por %p108, %p109
      %p111 = scmp.ne.s32.totalorder %s103, %s105
      %p112 = scmp.eq.s32.totalorder %s18, 3
      %p113 = por %p111, %p112
      %p114 = scmp.ne.s32.totalorder %s105, %s106
      %p115 = scmp.eq.s32.totalorder %s18, 0
      %p116 = por %p114, %p115
      %p117 = scmp.ne.s32.totalorder %s105, %s106
      %p118 = scmp.eq.s32.totalorder %s19, 3
      %p119 = por %p117, %p118
      %p121 = scmp.ne.s32.totalorder %s106, %s120
      %p122 = scmp.eq.s32.totalorder %s19, 0
      %p123 = por %p121, %p122
      %s124 = ssub.s32 %s20, %s32
      %p125 = scmp.eq.s32.totalorder %s124, 0
      %s127 = sadd.s32 %s126, 1
      %s128 = scalar_select %p125, %s126, %s127
      %p131 = pneg %p125
      %p132 = scmp.eq.s32.totalorder %s13, 3
      %p133 = por %p131, %p132
      %p134 = scmp.ne.s32.totalorder %s126, %s129
      %p135 = scmp.eq.s32.totalorder %s13, 0
      %p136 = por %p134, %p135
      %p137 = scmp.ne.s32.totalorder %s126, %s129
      %p138 = scmp.eq.s32.totalorder %s18, 3
      %p139 = por %p137, %p138
      %p140 = scmp.ne.s32.totalorder %s129, %s130
      %p141 = scmp.eq.s32.totalorder %s18, 0
      %p142 = por %p140, %p141
      %p143 = scmp.ne.s32.totalorder %s129, %s130
      %p144 = scmp.eq.s32.totalorder %s19, 3
      %p145 = por %p143, %p144
      %p147 = scmp.ne.s32.totalorder %s130, %s146
      %p148 = scmp.eq.s32.totalorder %s19, 0
      %p149 = por %p147, %p148
      %p150 = scmp.le.s32.totalorder 1, %s13
      %p151 = scmp.lt.s32.totalorder %s13, 5
      %p152 = pnand %p150, %p151
      %p153 = pneg %p152
      // Predicated region
      $region9: #{tpu_custom_call.1} parent=5 // pred_check
        _
      $region10: #{tpu_custom_call.1} parent=5 // pred_check_branch
        %155 = sbr.rel (%p152) target = $region12
      $region11: #{tpu_custom_call.1} parent=5 // pred_region
        %s156 = ssub.s32 %s13, 1
        // Predicated region
        $region13: #{tpu_custom_call.1} parent=11 // pred_check
          %p157 = pneg %p74
        $region14: #{tpu_custom_call.1} parent=11 // pred_check_branch
          %159 = sbr.rel (%p157) target = $region16
        $region15: #{tpu_custom_call.1} parent=11 // pred_region
          _
        $region16: #{tpu_custom_call.1} parent=11 // pred_fallthru
          _
        // Predicated region
        $region17: #{tpu_custom_call.1} parent=11 // pred_check
          %p160 = pneg %p95
        $region18: #{tpu_custom_call.1} parent=11 // pred_check_branch
          %162 = sbr.rel (%p160) target = $region20
        $region19: #{tpu_custom_call.1} parent=11 // pred_region
          _
        $region20: #{tpu_custom_call.1} parent=11 // pred_fallthru
          _
        // Predicated region
        $region21: #{tpu_custom_call.1} parent=11 // pred_check
          %p163 = pneg %p116
        $region22: #{tpu_custom_call.1} parent=11 // pred_check_branch
          %165 = sbr.rel (%p163) target = $region24
        $region23: #{tpu_custom_call.1} parent=11 // pred_region
          _
        $region24: #{tpu_custom_call.1} parent=11 // pred_fallthru
          _
      $region12: #{tpu_custom_call.1} parent=5 // pred_fallthru
        _
      %p166 = scmp.lt.s32.totalorder %s13, 4
      // Predicated region
      $region25: #{tpu_custom_call.1} parent=5 // pred_check
        %p167 = pneg %p166
      $region26: #{tpu_custom_call.1} parent=5 // pred_check_branch
        %169 = sbr.rel (%p167) target = $region28
      $region27: #{tpu_custom_call.1} parent=5 // pred_region
        // Predicated region
        $region29: #{tpu_custom_call.1} parent=27 // pred_check
          %p170 = pneg %p47
        $region30: #{tpu_custom_call.1} parent=27 // pred_check_branch
          %172 = sbr.rel (%p170) target = $region32
        $region31: #{tpu_custom_call.1} parent=27 // pred_region
          %s173 = sand.u32 %s37, 1
          %s174 = sand.u32 %s37, 1
          %s175 = smul.addr %s174, 64
          %s176 = scalar_lea.vmem [#allocation6], %s175
          %s177 = smul.u32 16, %s20
          %s178 = smul.addr %s177, 2
          %s179 = sadd.s32 %s21, %s178
          %s180 = smul.addr %s179, 4
          %s181 = scalar_lea.vmem %s0, %s180
          // Predicated region
          $region33: #{tpu_custom_call.1} parent=31 // pred_check
            _
          $region34: #{tpu_custom_call.1} parent=31 // pred_check_branch
            %183 = sbr.rel (0) target = $region36
          $region35: #{tpu_custom_call.1} parent=31 // pred_region
            // Predicated region
            $region37: #{tpu_custom_call.1} parent=35 // pred_check
              _
            $region38: #{tpu_custom_call.1} parent=35 // pred_check_branch
              %185 = sbr.rel target = $region40
            $region39: #{tpu_custom_call.1} parent=35 // pred_region
              // Predicated region
              $region52: #{tpu_custom_call.1} parent=39 // pred_check
                _
              $region53: #{tpu_custom_call.1} parent=39 // pred_check_branch
                %231 = sbr.rel (0) target = $region55
              $region54: #{tpu_custom_call.1} parent=39 // pred_region
                loop: start=0, step=1, limit=1
                $region56: #{tpu_custom_call.1} parent=54 // loop_pre_header
                  _
                $region57: #{tpu_custom_call.1} parent=54 // loop_header
                  %s233 = sphi 0, %s237
                  %p234 = scmp.ge.s32.totalorder %s233, 1
                  %s238 = sphi %s181, %s181
                  %s239 = sphi %s176, %s176
                $region58: #{tpu_custom_call.1} parent=54 // loop_header_branch
                  %236 = sbr.rel (%p234) target = $region62
                $region59: #{tpu_custom_call.1} parent=54 // loop_body
                  _
                $region60: #{tpu_custom_call.1} parent=54 // loop_footer
                  %s237 = sadd.s32 1, %s233
                $region61: #{tpu_custom_call.1} parent=54 // loop_footer_branch
                  %232 = sbr.rel target = $region57
                $region62: #{tpu_custom_call.1} parent=54 // loop_exit
                  _
                %s241 = ssub.s32 16, 1
                loop: start=0, step=1, limit=1
                $region63: #{tpu_custom_call.1} parent=54 // loop_pre_header
                  _
                $region64: #{tpu_custom_call.1} parent=54 // loop_header
                  %s243 = sphi 0, %s247
                  %p244 = scmp.ge.s32.totalorder %s243, 1
                  %s248 = sphi %s181, %s181
                  %s249 = sphi %s176, %s176
                $region65: #{tpu_custom_call.1} parent=54 // loop_header_branch
                  %246 = sbr.rel (%p244) target = $region69
                $region66: #{tpu_custom_call.1} parent=54 // loop_body
                  %v250 = vld [vmem:[%s248] sm:%s241]
                  %251 = vst [vmem:[%s249] sm:%s241] %v250
                  %v252 = vld [vmem:[%s248 + $0x8] sm:%s241]
                  %253 = vst [vmem:[%s249 + $0x4] sm:%s241] %v252
                  %v254 = vld [vmem:[%s248 + $0x10] sm:%s241]
                  %255 = vst [vmem:[%s249 + $0x8] sm:%s241] %v254
                  %v256 = vld [vmem:[%s248 + $0x18] sm:%s241]
                  %257 = vst [vmem:[%s249 + $0xc] sm:%s241] %v256
                  %v258 = vld [vmem:[%s248 + $0x20] sm:%s241]
                  %259 = vst [vmem:[%s249 + $0x10] sm:%s241] %v258
                  %v260 = vld [vmem:[%s248 + $0x28] sm:%s241]
                  %261 = vst [vmem:[%s249 + $0x14] sm:%s241] %v260
                  %v262 = vld [vmem:[%s248 + $0x30] sm:%s241]
                  %263 = vst [vmem:[%s249 + $0x18] sm:%s241] %v262
                  %v264 = vld [vmem:[%s248 + $0x38] sm:%s241]
                  %265 = vst [vmem:[%s249 + $0x1c] sm:%s241] %v264
                  %v266 = vld [vmem:[%s248 + $0x40] sm:%s241]
                  %267 = vst [vmem:[%s249 + $0x20] sm:%s241] %v266
                  %v268 = vld [vmem:[%s248 + $0x48] sm:%s241]
                  %269 = vst [vmem:[%s249 + $0x24] sm:%s241] %v268
                  %v270 = vld [vmem:[%s248 + $0x50] sm:%s241]
                  %271 = vst [vmem:[%s249 + $0x28] sm:%s241] %v270
                  %v272 = vld [vmem:[%s248 + $0x58] sm:%s241]
                  %273 = vst [vmem:[%s249 + $0x2c] sm:%s241] %v272
                  %v274 = vld [vmem:[%s248 + $0x60] sm:%s241]
                  %275 = vst [vmem:[%s249 + $0x30] sm:%s241] %v274
                  %v276 = vld [vmem:[%s248 + $0x68] sm:%s241]
                  %277 = vst [vmem:[%s249 + $0x34] sm:%s241] %v276
                  %v278 = vld [vmem:[%s248 + $0x70] sm:%s241]
                  %279 = vst [vmem:[%s249 + $0x38] sm:%s241] %v278
                  %v280 = vld [vmem:[%s248 + $0x78] sm:%s241]
                  %281 = vst [vmem:[%s249 + $0x3c] sm:%s241] %v280
                $region67: #{tpu_custom_call.1} parent=54 // loop_footer
                  %s247 = sadd.s32 1, %s243
                $region68: #{tpu_custom_call.1} parent=54 // loop_footer_branch
                  %242 = sbr.rel target = $region64
                $region69: #{tpu_custom_call.1} parent=54 // loop_exit
                  _
              $region55: #{tpu_custom_call.1} parent=39 // pred_fallthru
                _
            $region40: #{tpu_custom_call.1} parent=35 // pred_fallthru
              _
            // Predicated region
            $region41: #{tpu_custom_call.1} parent=35 // pred_check
              _
            $region42: #{tpu_custom_call.1} parent=35 // pred_check_branch
              %187 = sbr.rel (0) target = $region44
            $region43: #{tpu_custom_call.1} parent=35 // pred_region
              %s189 = ssub.s32 16, 1
              loop: start=0, step=1, limit=1
              $region45: #{tpu_custom_call.1} parent=43 // loop_pre_header
                _
              $region46: #{tpu_custom_call.1} parent=43 // loop_header
                %s191 = sphi 0, %s195
                %p192 = scmp.ge.s32.totalorder %s191, 1
                %s196 = sphi %s181, %s181
                %s197 = sphi %s176, %s176
              $region47: #{tpu_custom_call.1} parent=43 // loop_header_branch
                %194 = sbr.rel (%p192) target = $region51
              $region48: #{tpu_custom_call.1} parent=43 // loop_body
                %v198 = vld [vmem:[%s196] sm:%s189]
                %199 = vst [vmem:[%s197] sm:%s189] %v198
                %v200 = vld [vmem:[%s196 + $0x8] sm:%s189]
                %201 = vst [vmem:[%s197 + $0x4] sm:%s189] %v200
                %v202 = vld [vmem:[%s196 + $0x10] sm:%s189]
                %203 = vst [vmem:[%s197 + $0x8] sm:%s189] %v202
                %v204 = vld [vmem:[%s196 + $0x18] sm:%s189]
                %205 = vst [vmem:[%s197 + $0xc] sm:%s189] %v204
                %v206 = vld [vmem:[%s196 + $0x20] sm:%s189]
                %207 = vst [vmem:[%s197 + $0x10] sm:%s189] %v206
                %v208 = vld [vmem:[%s196 + $0x28] sm:%s189]
                %209 = vst [vmem:[%s197 + $0x14] sm:%s189] %v208
                %v210 = vld [vmem:[%s196 + $0x30] sm:%s189]
                %211 = vst [vmem:[%s197 + $0x18] sm:%s189] %v210
                %v212 = vld [vmem:[%s196 + $0x38] sm:%s189]
                %213 = vst [vmem:[%s197 + $0x1c] sm:%s189] %v212
                %v214 = vld [vmem:[%s196 + $0x40] sm:%s189]
                %215 = vst [vmem:[%s197 + $0x20] sm:%s189] %v214
                %v216 = vld [vmem:[%s196 + $0x48] sm:%s189]
                %217 = vst [vmem:[%s197 + $0x24] sm:%s189] %v216
                %v218 = vld [vmem:[%s196 + $0x50] sm:%s189]
                %219 = vst [vmem:[%s197 + $0x28] sm:%s189] %v218
                %v220 = vld [vmem:[%s196 + $0x58] sm:%s189]
                %221 = vst [vmem:[%s197 + $0x2c] sm:%s189] %v220
                %v222 = vld [vmem:[%s196 + $0x60] sm:%s189]
                %223 = vst [vmem:[%s197 + $0x30] sm:%s189] %v222
                %v224 = vld [vmem:[%s196 + $0x68] sm:%s189]
                %225 = vst [vmem:[%s197 + $0x34] sm:%s189] %v224
                %v226 = vld [vmem:[%s196 + $0x70] sm:%s189]
                %227 = vst [vmem:[%s197 + $0x38] sm:%s189] %v226
                %v228 = vld [vmem:[%s196 + $0x78] sm:%s189]
                %229 = vst [vmem:[%s197 + $0x3c] sm:%s189] %v228
              $region49: #{tpu_custom_call.1} parent=43 // loop_footer
                %s195 = sadd.s32 1, %s191
              $region50: #{tpu_custom_call.1} parent=43 // loop_footer_branch
                %190 = sbr.rel target = $region46
              $region51: #{tpu_custom_call.1} parent=43 // loop_exit
                _
            $region44: #{tpu_custom_call.1} parent=35 // pred_fallthru
              _
          $region36: #{tpu_custom_call.1} parent=31 // pred_fallthru
            _
          %282 = vnop
        $region32: #{tpu_custom_call.1} parent=27 // pred_fallthru
          _
      $region28: #{tpu_custom_call.1} parent=5 // pred_fallthru
        _
      %p283 = scmp.le.s32.totalorder 1, %s13
      %p284 = scmp.lt.s32.totalorder %s13, 5
      %p285 = pnand %p283, %p284
      %p286 = pneg %p285
      // Predicated region
      $region70: #{tpu_custom_call.1} parent=5 // pred_check
        _
      $region71: #{tpu_custom_call.1} parent=5 // pred_check_branch
        %288 = sbr.rel (%p285) target = $region73
      $region72: #{tpu_custom_call.1} parent=5 // pred_region
        %s289 = ssub.s32 %s13, 1
        %s290 = sand.u32 %s40, 1
        %s291 = sand.u32 %s40, 1
        %s292 = smul.addr %s291, 64
        %s293 = scalar_lea.vmem [#allocation6], %s292
        // Predicated region
        $region74: #{tpu_custom_call.1} parent=72 // pred_check
          %p294 = pneg %p53
        $region75: #{tpu_custom_call.1} parent=72 // pred_check_branch
          %296 = sbr.rel (%p294) target = $region77
        $region76: #{tpu_custom_call.1} parent=72 // pred_region
          _
        $region77: #{tpu_custom_call.1} parent=72 // pred_fallthru
          _
        %s297 = sand.u32 %s40, 1
        %s298 = sand.u32 %s40, 1
        %s299 = smul.addr %s298, 64
        %s300 = scalar_lea.vmem [#allocation6], %s299
        %p301 = pneg %p53
        %p302 = pneg %p50
        %p303 = pneg %p74
        %p304 = pneg %p71
        %p305 = pneg %p95
        %p306 = pneg %p92
        %p307 = pneg %p116
        %p308 = pneg %p113
        %p309 = pneg %p142
        %p310 = pneg %p139
        %s311 = sand.u32 %s129, 1
        %s312 = scalar_lea.sflag [#allocation8], %s311
        %s313 = sand.u32 %s129, 1
        %s314 = smul.addr %s313, 128
        %s315 = scalar_lea.vmem [#allocation7], %s314
        %s316 = smul.u32 16, %s22
        %s317 = smul.u32 16, %s22
        %v319 = vld [vmem:[%s2] sm:$0xff]
        %v320 = vld [vmem:[%s2 + $0x8] sm:$0xff]
        %v321 = vld [vmem:[%s3] sm:$0x1]
        %p322 = scmp.eq.s32.totalorder %s23, 0
        // Predicated region
        $region78: #{tpu_custom_call.1} parent=72 // pred_check
          %p323 = pneg %p322
        $region79: #{tpu_custom_call.1} parent=72 // pred_check_branch
          %325 = sbr.rel (%p323) target = $region81
        $region80: #{tpu_custom_call.1} parent=72 // pred_region
          %s326 = smul.u32 %s22, 128
          %s327 = scalar_lea.vmem %s1, %s326
          %v328 = vld [vmem:[%s327] sm:$0xff]
          %v329 = vld [vmem:[%s327 + $0x8] sm:$0xff]
          %v330 = vld [vmem:[%s327 + $0x10] sm:$0xff]
          %v331 = vld [vmem:[%s327 + $0x18] sm:$0xff]
          %v332 = vld [vmem:[%s327 + $0x20] sm:$0xff]
          %v333 = vld [vmem:[%s327 + $0x28] sm:$0xff]
          %v334 = vld [vmem:[%s327 + $0x30] sm:$0xff]
          %v335 = vld [vmem:[%s327 + $0x38] sm:$0xff]
          %v336 = vld [vmem:[%s327 + $0x40] sm:$0xff]
          %v337 = vld [vmem:[%s327 + $0x48] sm:$0xff]
          %v338 = vld [vmem:[%s327 + $0x50] sm:$0xff]
          %v339 = vld [vmem:[%s327 + $0x58] sm:$0xff]
          %v340 = vld [vmem:[%s327 + $0x60] sm:$0xff]
          %v341 = vld [vmem:[%s327 + $0x68] sm:$0xff]
          %v342 = vld [vmem:[%s327 + $0x70] sm:$0xff]
          %v343 = vld [vmem:[%s327 + $0x78] sm:$0xff]
          %v345 = vlaneseq
          %v346 = vshrl.u32 %v345, 7
          %v347 = vsub.s32 0, %v346
          %v348 = vrot.slane %v321, %v347
          %vm350 = vcmask 130048
          %v352 = vsel %vm350, %v328, 0
          %v355 = vsel %vm350, %v329, 0
          %v358 = vsel %vm350, %v330, 0
          %v361 = vsel %vm350, %v331, 0
          %v364 = vsel %vm350, %v332, 0
          %v367 = vsel %vm350, %v333, 0
          %v370 = vsel %vm350, %v334, 0
          %v373 = vsel %vm350, %v335, 0
          %v376 = vsel %vm350, %v336, 0
          %v379 = vsel %vm350, %v337, 0
          %v382 = vsel %vm350, %v338, 0
          %v385 = vsel %vm350, %v339, 0
          %v388 = vsel %vm350, %v340, 0
          %v391 = vsel %vm350, %v341, 0
          %v394 = vsel %vm350, %v342, 0
          %v397 = vsel %vm350, %v343, 0
          %399 = vmatprep.subr.mxu0 0.0
          %400 = vmatpush1.msra.mxu0 0.0
          %401 = vmatprep.subr.mxu0 0.0
          %402 = vmatpush1.msra.mxu0 0.0
          %403 = vmatprep.subr.mxu0 0.0
          %404 = vmatpush1.msra.mxu0 0.0
          %405 = vmatprep.subr.mxu0 0.0
          %406 = vmatpush1.msra.mxu0 0.0
          %407 = vmatprep.subr.mxu0 0.0
          %408 = vmatpush1.msra.mxu0 0.0
          %409 = vmatprep.subr.mxu0 0.0
          %410 = vmatpush1.msra.mxu0 0.0
          %411 = vmatprep.subr.mxu0 0.0
          %412 = vmatpush1.msra.mxu0 0.0
          %413 = vmatprep.subr.mxu0 0.0
          %414 = vmatpush1.msra.mxu0 0.0
          %415 = vmatprep.subr.mxu0 0.0
          %416 = vmatpush1.msra.mxu0 0.0
          %417 = vmatprep.subr.mxu0 0.0
          %418 = vmatpush1.msra.mxu0 0.0
          %419 = vmatprep.subr.mxu0 0.0
          %420 = vmatpush1.msra.mxu0 0.0
          %421 = vmatprep.subr.mxu0 0.0
          %422 = vmatpush1.msra.mxu0 0.0
          %423 = vmatprep.subr.mxu0 0.0
          %424 = vmatpush1.msra.mxu0 0.0
          %425 = vmatprep.subr.mxu0 0.0
          %426 = vmatpush1.msra.mxu0 0.0
          %427 = vmatprep.subr.mxu0 0.0
          %428 = vmatpush1.msra.mxu0 %v320
          %429 = vmatprep.subr.mxu0 0.0
          %430 = vmatpush1.msra.mxu0 %v319
          %431 = vmatprep.subr.mxu0 0.0
          %432 = vmatpush2.msra.mxu0 0.0
          %433 = vmatprep.subr.mxu0 0.0
          %434 = vmatpush2.msra.mxu0 0.0
          %435 = vmatprep.subr.mxu0 0.0
          %436 = vmatpush2.msra.mxu0 0.0
          %437 = vmatprep.subr.mxu0 0.0
          %438 = vmatpush2.msra.mxu0 0.0
          %439 = vmatprep.subr.mxu0 0.0
          %440 = vmatpush2.msra.mxu0 0.0
          %441 = vmatprep.subr.mxu0 0.0
          %442 = vmatpush2.msra.mxu0 0.0
          %443 = vmatprep.subr.mxu0 0.0
          %444 = vmatpush2.msra.mxu0 0.0
          %445 = vmatprep.subr.mxu0 0.0
          %446 = vmatpush2.msra.mxu0 0.0
          %447 = vmatprep.subr.mxu0 0.0
          %448 = vmatpush2.msra.mxu0 0.0
          %449 = vmatprep.subr.mxu0 0.0
          %450 = vmatpush2.msra.mxu0 0.0
          %451 = vmatprep.subr.mxu0 0.0
          %452 = vmatpush2.msra.mxu0 0.0
          %453 = vmatprep.subr.mxu0 0.0
          %454 = vmatpush2.msra.mxu0 0.0
          %455 = vmatprep.subr.mxu0 0.0
          %456 = vmatpush2.msra.mxu0 0.0
          %457 = vmatprep.subr.mxu0 0.0
          %458 = vmatpush2.msra.mxu0 0.0
          %459 = vmatprep.subr.mxu0 0.0
          %460 = vmatpush2.msra.mxu0 0.0
          %461 = vmatprep.subr.mxu0 0.0
          %462 = vmatpush2.msra.mxu0 0.0
          %463 = vmatprep.mubr.f32.mxu0 0.0
          %464 = vmatmul.mubr.f32.gmra.mxu0 %v352
          %v465 = vpop.f32.mrf.mxu0
          %v466 = vadd.f32 %v348, %v465
          %v467 = vpop.f32.mrf.mxu0
          %468 = vmatprep.mubr.f32.mxu0 0.0
          %469 = vmatmul.mubr.f32.gmra.mxu0 %v355
          %v470 = vpop.f32.mrf.mxu0
          %v471 = vadd.f32 %v348, %v470
          %v472 = vpop.f32.mrf.mxu0
          %473 = vmatprep.mubr.f32.mxu0 0.0
          %474 = vmatmul.mubr.f32.gmra.mxu0 %v358
          %v475 = vpop.f32.mrf.mxu0
          %v476 = vadd.f32 %v348, %v475
          %v477 = vpop.f32.mrf.mxu0
          %478 = vmatprep.mubr.f32.mxu0 0.0
          %479 = vmatmul.mubr.f32.gmra.mxu0 %v361
          %v480 = vpop.f32.mrf.mxu0
          %v481 = vadd.f32 %v348, %v480
          %v482 = vpop.f32.mrf.mxu0
          %483 = vmatprep.mubr.f32.mxu0 0.0
          %484 = vmatmul.mubr.f32.gmra.mxu0 %v364
          %v485 = vpop.f32.mrf.mxu0
          %v486 = vadd.f32 %v348, %v485
          %v487 = vpop.f32.mrf.mxu0
          %488 = vmatprep.mubr.f32.mxu0 0.0
          %489 = vmatmul.mubr.f32.gmra.mxu0 %v367
          %v490 = vpop.f32.mrf.mxu0
          %v491 = vadd.f32 %v348, %v490
          %v492 = vpop.f32.mrf.mxu0
          %493 = vmatprep.mubr.f32.mxu0 0.0
          %494 = vmatmul.mubr.f32.gmra.mxu0 %v370
          %v495 = vpop.f32.mrf.mxu0
          %v496 = vadd.f32 %v348, %v495
          %v497 = vpop.f32.mrf.mxu0
          %498 = vmatprep.mubr.f32.mxu0 0.0
          %499 = vmatmul.mubr.f32.gmra.mxu0 %v373
          %v500 = vpop.f32.mrf.mxu0
          %v501 = vadd.f32 %v348, %v500
          %v502 = vpop.f32.mrf.mxu0
          %503 = vmatprep.mubr.f32.mxu0 0.0
          %504 = vmatmul.mubr.f32.gmra.mxu0 %v376
          %v505 = vpop.f32.mrf.mxu0
          %v506 = vadd.f32 %v348, %v505
          %v507 = vpop.f32.mrf.mxu0
          %508 = vmatprep.mubr.f32.mxu0 0.0
          %509 = vmatmul.mubr.f32.gmra.mxu0 %v379
          %v510 = vpop.f32.mrf.mxu0
          %v511 = vadd.f32 %v348, %v510
          %v512 = vpop.f32.mrf.mxu0
          %513 = vmatprep.mubr.f32.mxu0 0.0
          %514 = vmatmul.mubr.f32.gmra.mxu0 %v382
          %v515 = vpop.f32.mrf.mxu0
          %v516 = vadd.f32 %v348, %v515
          %v517 = vpop.f32.mrf.mxu0
          %518 = vmatprep.mubr.f32.mxu0 0.0
          %519 = vmatmul.mubr.f32.gmra.mxu0 %v385
          %v520 = vpop.f32.mrf.mxu0
          %v521 = vadd.f32 %v348, %v520
          %v522 = vpop.f32.mrf.mxu0
          %523 = vmatprep.mubr.f32.mxu0 0.0
          %524 = vmatmul.mubr.f32.gmra.mxu0 %v388
          %v525 = vpop.f32.mrf.mxu0
          %v526 = vadd.f32 %v348, %v525
          %v527 = vpop.f32.mrf.mxu0
          %528 = vmatprep.mubr.f32.mxu0 0.0
          %529 = vmatmul.mubr.f32.gmra.mxu0 %v391
          %v530 = vpop.f32.mrf.mxu0
          %v531 = vadd.f32 %v348, %v530
          %v532 = vpop.f32.mrf.mxu0
          %533 = vmatprep.mubr.f32.mxu0 0.0
          %534 = vmatmul.mubr.f32.gmra.mxu0 %v394
          %v535 = vpop.f32.mrf.mxu0
          %v536 = vadd.f32 %v348, %v535
          %v537 = vpop.f32.mrf.mxu0
          %538 = vmatprep.mubr.f32.mxu0 0.0
          %539 = vmatmul.mubr.f32.gmra.mxu0 %v397
          %v540 = vpop.f32.mrf.mxu0
          %v541 = vadd.f32 %v348, %v540
          %v542 = vpop.f32.mrf.mxu0
          %543 = vdwg.mxu0
          %544 = vst [vmem:[#allocation5] sm:$0xff] %v466
          %545 = vst [vmem:[#allocation5 + $0x8] sm:$0xff] %v471
          %546 = vst [vmem:[#allocation5 + $0x10] sm:$0xff] %v476
          %547 = vst [vmem:[#allocation5 + $0x18] sm:$0xff] %v481
          %548 = vst [vmem:[#allocation5 + $0x20] sm:$0xff] %v486
          %549 = vst [vmem:[#allocation5 + $0x28] sm:$0xff] %v491
          %550 = vst [vmem:[#allocation5 + $0x30] sm:$0xff] %v496
          %551 = vst [vmem:[#allocation5 + $0x38] sm:$0xff] %v501
          %552 = vst [vmem:[#allocation5 + $0x40] sm:$0xff] %v506
          %553 = vst [vmem:[#allocation5 + $0x48] sm:$0xff] %v511
          %554 = vst [vmem:[#allocation5 + $0x50] sm:$0xff] %v516
          %555 = vst [vmem:[#allocation5 + $0x58] sm:$0xff] %v521
          %556 = vst [vmem:[#allocation5 + $0x60] sm:$0xff] %v526
          %557 = vst [vmem:[#allocation5 + $0x68] sm:$0xff] %v531
          %558 = vst [vmem:[#allocation5 + $0x70] sm:$0xff] %v536
          %559 = vst [vmem:[#allocation5 + $0x78] sm:$0xff] %v541
          %vm560 = vcmask 7168
          %561 = vst.msk [vmem:[#allocation2] sm:$0xff] %vm560, -1e+30
          %562 = vst.msk [vmem:[#allocation2 + $0x8] sm:$0xff] %vm560, -1e+30
          %563 = vst.msk [vmem:[#allocation2 + $0x10] sm:$0xff] %vm560, -1e+30
          %564 = vst.msk [vmem:[#allocation2 + $0x18] sm:$0xff] %vm560, -1e+30
          %565 = vst.msk [vmem:[#allocation2 + $0x20] sm:$0xff] %vm560, -1e+30
          %566 = vst.msk [vmem:[#allocation2 + $0x28] sm:$0xff] %vm560, -1e+30
          %567 = vst.msk [vmem:[#allocation2 + $0x30] sm:$0xff] %vm560, -1e+30
          %568 = vst.msk [vmem:[#allocation2 + $0x38] sm:$0xff] %vm560, -1e+30
          %569 = vst.msk [vmem:[#allocation2 + $0x40] sm:$0xff] %vm560, -1e+30
          %570 = vst.msk [vmem:[#allocation2 + $0x48] sm:$0xff] %vm560, -1e+30
          %571 = vst.msk [vmem:[#allocation2 + $0x50] sm:$0xff] %vm560, -1e+30
          %572 = vst.msk [vmem:[#allocation2 + $0x58] sm:$0xff] %vm560, -1e+30
          %573 = vst.msk [vmem:[#allocation2 + $0x60] sm:$0xff] %vm560, -1e+30
          %574 = vst.msk [vmem:[#allocation2 + $0x68] sm:$0xff] %vm560, -1e+30
          %575 = vst.msk [vmem:[#allocation2 + $0x70] sm:$0xff] %vm560, -1e+30
          %576 = vst.msk [vmem:[#allocation2 + $0x78] sm:$0xff] %vm560, -1e+30
          %577 = vst.msk [vmem:[#allocation3] sm:$0xff] %vm560, 0.0
          %578 = vst.msk [vmem:[#allocation3 + $0x8] sm:$0xff] %vm560, 0.0
          %579 = vst.msk [vmem:[#allocation3 + $0x10] sm:$0xff] %vm560, 0.0
          %580 = vst.msk [vmem:[#allocation3 + $0x18] sm:$0xff] %vm560, 0.0
          %581 = vst.msk [vmem:[#allocation3 + $0x20] sm:$0xff] %vm560, 0.0
          %582 = vst.msk [vmem:[#allocation3 + $0x28] sm:$0xff] %vm560, 0.0
          %583 = vst.msk [vmem:[#allocation3 + $0x30] sm:$0xff] %vm560, 0.0
          %584 = vst.msk [vmem:[#allocation3 + $0x38] sm:$0xff] %vm560, 0.0
          %585 = vst.msk [vmem:[#allocation3 + $0x40] sm:$0xff] %vm560, 0.0
          %586 = vst.msk [vmem:[#allocation3 + $0x48] sm:$0xff] %vm560, 0.0
          %587 = vst.msk [vmem:[#allocation3 + $0x50] sm:$0xff] %vm560, 0.0
          %588 = vst.msk [vmem:[#allocation3 + $0x58] sm:$0xff] %vm560, 0.0
          %589 = vst.msk [vmem:[#allocation3 + $0x60] sm:$0xff] %vm560, 0.0
          %590 = vst.msk [vmem:[#allocation3 + $0x68] sm:$0xff] %vm560, 0.0
          %591 = vst.msk [vmem:[#allocation3 + $0x70] sm:$0xff] %vm560, 0.0
          %592 = vst.msk [vmem:[#allocation3 + $0x78] sm:$0xff] %vm560, 0.0
          %593 = vst [vmem:[#allocation4] sm:$0xff] 0.0
          %594 = vst [vmem:[#allocation4 + $0x8] sm:$0xff] 0.0
          %595 = vst [vmem:[#allocation4 + $0x10] sm:$0xff] 0.0
          %596 = vst [vmem:[#allocation4 + $0x18] sm:$0xff] 0.0
          %597 = vst [vmem:[#allocation4 + $0x20] sm:$0xff] 0.0
          %598 = vst [vmem:[#allocation4 + $0x28] sm:$0xff] 0.0
          %599 = vst [vmem:[#allocation4 + $0x30] sm:$0xff] 0.0
          %600 = vst [vmem:[#allocation4 + $0x38] sm:$0xff] 0.0
          %601 = vst [vmem:[#allocation4 + $0x40] sm:$0xff] 0.0
          %602 = vst [vmem:[#allocation4 + $0x48] sm:$0xff] 0.0
          %603 = vst [vmem:[#allocation4 + $0x50] sm:$0xff] 0.0
          %604 = vst [vmem:[#allocation4 + $0x58] sm:$0xff] 0.0
          %605 = vst [vmem:[#allocation4 + $0x60] sm:$0xff] 0.0
          %606 = vst [vmem:[#allocation4 + $0x68] sm:$0xff] 0.0
          %607 = vst [vmem:[#allocation4 + $0x70] sm:$0xff] 0.0
          %608 = vst [vmem:[#allocation4 + $0x78] sm:$0xff] 0.0
        $region81: #{tpu_custom_call.1} parent=72 // pred_fallthru
          _
        %v609 = vld [vmem:[#allocation5] sm:$0xff]
        %v610 = vld [vmem:[#allocation5 + $0x8] sm:$0xff]
        %v611 = vld [vmem:[#allocation5 + $0x10] sm:$0xff]
        %v612 = vld [vmem:[#allocation5 + $0x18] sm:$0xff]
        %v613 = vld [vmem:[#allocation5 + $0x20] sm:$0xff]
        %v614 = vld [vmem:[#allocation5 + $0x28] sm:$0xff]
        %v615 = vld [vmem:[#allocation5 + $0x30] sm:$0xff]
        %v616 = vld [vmem:[#allocation5 + $0x38] sm:$0xff]
        %v617 = vld [vmem:[#allocation5 + $0x40] sm:$0xff]
        %v618 = vld [vmem:[#allocation5 + $0x48] sm:$0xff]
        %v619 = vld [vmem:[#allocation5 + $0x50] sm:$0xff]
        %v620 = vld [vmem:[#allocation5 + $0x58] sm:$0xff]
        %v621 = vld [vmem:[#allocation5 + $0x60] sm:$0xff]
        %v622 = vld [vmem:[#allocation5 + $0x68] sm:$0xff]
        %v623 = vld [vmem:[#allocation5 + $0x70] sm:$0xff]
        %v624 = vld [vmem:[#allocation5 + $0x78] sm:$0xff]
        %s625 = smul.u32 %s23, 128
        %s626 = scalar_lea.vmem %s1, %s625
        %v627 = vld [vmem:[%s626] sm:$0xff]
        %v628 = vld [vmem:[%s626 + $0x8] sm:$0xff]
        %v629 = vld [vmem:[%s626 + $0x10] sm:$0xff]
        %v630 = vld [vmem:[%s626 + $0x18] sm:$0xff]
        %v631 = vld [vmem:[%s626 + $0x20] sm:$0xff]
        %v632 = vld [vmem:[%s626 + $0x28] sm:$0xff]
        %v633 = vld [vmem:[%s626 + $0x30] sm:$0xff]
        %v634 = vld [vmem:[%s626 + $0x38] sm:$0xff]
        %v635 = vld [vmem:[%s626 + $0x40] sm:$0xff]
        %v636 = vld [vmem:[%s626 + $0x48] sm:$0xff]
        %v637 = vld [vmem:[%s626 + $0x50] sm:$0xff]
        %v638 = vld [vmem:[%s626 + $0x58] sm:$0xff]
        %v639 = vld [vmem:[%s626 + $0x60] sm:$0xff]
        %v640 = vld [vmem:[%s626 + $0x68] sm:$0xff]
        %v641 = vld [vmem:[%s626 + $0x70] sm:$0xff]
        %v642 = vld [vmem:[%s626 + $0x78] sm:$0xff]
        %v644 = vlaneseq
        %v645 = vshrl.u32 %v644, 7
        %v646 = vsub.s32 0, %v645
        %v647 = vrot.slane %v321, %v646
        %vm649 = vcmask 130048
        %v651 = vsel %vm649, %v627, 0
        %v654 = vsel %vm649, %v628, 0
        %v657 = vsel %vm649, %v629, 0
        %v660 = vsel %vm649, %v630, 0
        %v663 = vsel %vm649, %v631, 0
        %v666 = vsel %vm649, %v632, 0
        %v669 = vsel %vm649, %v633, 0
        %v672 = vsel %vm649, %v634, 0
        %v675 = vsel %vm649, %v635, 0
        %v678 = vsel %vm649, %v636, 0
        %v681 = vsel %vm649, %v637, 0
        %v684 = vsel %vm649, %v638, 0
        %v687 = vsel %vm649, %v639, 0
        %v690 = vsel %vm649, %v640, 0
        %v693 = vsel %vm649, %v641, 0
        %v696 = vsel %vm649, %v642, 0
        %698 = vmatprep.subr.mxu0 0.0
        %699 = vmatpush1.msra.mxu0 0.0
        %700 = vmatprep.subr.mxu0 0.0
        %701 = vmatpush1.msra.mxu0 0.0
        %702 = vmatprep.subr.mxu0 0.0
        %703 = vmatpush1.msra.mxu0 0.0
        %704 = vmatprep.subr.mxu0 0.0
        %705 = vmatpush1.msra.mxu0 0.0
        %706 = vmatprep.subr.mxu0 0.0
        %707 = vmatpush1.msra.mxu0 0.0
        %708 = vmatprep.subr.mxu0 0.0
        %709 = vmatpush1.msra.mxu0 0.0
        %710 = vmatprep.subr.mxu0 0.0
        %711 = vmatpush1.msra.mxu0 0.0
        %712 = vmatprep.subr.mxu0 0.0
        %713 = vmatpush1.msra.mxu0 0.0
        %714 = vmatprep.subr.mxu0 0.0
        %715 = vmatpush1.msra.mxu0 0.0
        %716 = vmatprep.subr.mxu0 0.0
        %717 = vmatpush1.msra.mxu0 0.0
        %718 = vmatprep.subr.mxu0 0.0
        %719 = vmatpush1.msra.mxu0 0.0
        %720 = vmatprep.subr.mxu0 0.0
        %721 = vmatpush1.msra.mxu0 0.0
        %722 = vmatprep.subr.mxu0 0.0
        %723 = vmatpush1.msra.mxu0 0.0
        %724 = vmatprep.subr.mxu0 0.0
        %725 = vmatpush1.msra.mxu0 0.0
        %726 = vmatprep.subr.mxu0 0.0
        %727 = vmatpush1.msra.mxu0 %v320
        %728 = vmatprep.subr.mxu0 0.0
        %729 = vmatpush1.msra.mxu0 %v319
        %730 = vmatprep.subr.mxu0 0.0
        %731 = vmatpush2.msra.mxu0 0.0
        %732 = vmatprep.subr.mxu0 0.0
        %733 = vmatpush2.msra.mxu0 0.0
        %734 = vmatprep.subr.mxu0 0.0
        %735 = vmatpush2.msra.mxu0 0.0
        %736 = vmatprep.subr.mxu0 0.0
        %737 = vmatpush2.msra.mxu0 0.0
        %738 = vmatprep.subr.mxu0 0.0
        %739 = vmatpush2.msra.mxu0 0.0
        %740 = vmatprep.subr.mxu0 0.0
        %741 = vmatpush2.msra.mxu0 0.0
        %742 = vmatprep.subr.mxu0 0.0
        %743 = vmatpush2.msra.mxu0 0.0
        %744 = vmatprep.subr.mxu0 0.0
        %745 = vmatpush2.msra.mxu0 0.0
        %746 = vmatprep.subr.mxu0 0.0
        %747 = vmatpush2.msra.mxu0 0.0
        %748 = vmatprep.subr.mxu0 0.0
        %749 = vmatpush2.msra.mxu0 0.0
        %750 = vmatprep.subr.mxu0 0.0
        %751 = vmatpush2.msra.mxu0 0.0
        %752 = vmatprep.subr.mxu0 0.0
        %753 = vmatpush2.msra.mxu0 0.0
        %754 = vmatprep.subr.mxu0 0.0
        %755 = vmatpush2.msra.mxu0 0.0
        %756 = vmatprep.subr.mxu0 0.0
        %757 = vmatpush2.msra.mxu0 0.0
        %758 = vmatprep.subr.mxu0 0.0
        %759 = vmatpush2.msra.mxu0 0.0
        %760 = vmatprep.subr.mxu0 0.0
        %761 = vmatpush2.msra.mxu0 0.0
        %762 = vmatprep.mubr.f32.mxu0 0.0
        %763 = vmatmul.mubr.f32.gmra.mxu0 %v651
        %v764 = vpop.f32.mrf.mxu0
        %v765 = vadd.f32 %v647, %v764
        %v766 = vpop.f32.mrf.mxu0
        %767 = vmatprep.mubr.f32.mxu0 0.0
        %768 = vmatmul.mubr.f32.gmra.mxu0 %v654
        %v769 = vpop.f32.mrf.mxu0
        %v770 = vadd.f32 %v647, %v769
        %v771 = vpop.f32.mrf.mxu0
        %772 = vmatprep.mubr.f32.mxu0 0.0
        %773 = vmatmul.mubr.f32.gmra.mxu0 %v657
        %v774 = vpop.f32.mrf.mxu0
        %v775 = vadd.f32 %v647, %v774
        %v776 = vpop.f32.mrf.mxu0
        %777 = vmatprep.mubr.f32.mxu0 0.0
        %778 = vmatmul.mubr.f32.gmra.mxu0 %v660
        %v779 = vpop.f32.mrf.mxu0
        %v780 = vadd.f32 %v647, %v779
        %v781 = vpop.f32.mrf.mxu0
        %782 = vmatprep.mubr.f32.mxu0 0.0
        %783 = vmatmul.mubr.f32.gmra.mxu0 %v663
        %v784 = vpop.f32.mrf.mxu0
        %v785 = vadd.f32 %v647, %v784
        %v786 = vpop.f32.mrf.mxu0
        %787 = vmatprep.mubr.f32.mxu0 0.0
        %788 = vmatmul.mubr.f32.gmra.mxu0 %v666
        %v789 = vpop.f32.mrf.mxu0
        %v790 = vadd.f32 %v647, %v789
        %v791 = vpop.f32.mrf.mxu0
        %792 = vmatprep.mubr.f32.mxu0 0.0
        %793 = vmatmul.mubr.f32.gmra.mxu0 %v669
        %v794 = vpop.f32.mrf.mxu0
        %v795 = vadd.f32 %v647, %v794
        %v796 = vpop.f32.mrf.mxu0
        %797 = vmatprep.mubr.f32.mxu0 0.0
        %798 = vmatmul.mubr.f32.gmra.mxu0 %v672
        %v799 = vpop.f32.mrf.mxu0
        %v800 = vadd.f32 %v647, %v799
        %v801 = vpop.f32.mrf.mxu0
        %802 = vmatprep.mubr.f32.mxu0 0.0
        %803 = vmatmul.mubr.f32.gmra.mxu0 %v675
        %v804 = vpop.f32.mrf.mxu0
        %v805 = vadd.f32 %v647, %v804
        %v806 = vpop.f32.mrf.mxu0
        %807 = vmatprep.mubr.f32.mxu0 0.0
        %808 = vmatmul.mubr.f32.gmra.mxu0 %v678
        %v809 = vpop.f32.mrf.mxu0
        %v810 = vadd.f32 %v647, %v809
        %v811 = vpop.f32.mrf.mxu0
        %812 = vmatprep.mubr.f32.mxu0 0.0
        %813 = vmatmul.mubr.f32.gmra.mxu0 %v681
        %v814 = vpop.f32.mrf.mxu0
        %v815 = vadd.f32 %v647, %v814
        %v816 = vpop.f32.mrf.mxu0
        %817 = vmatprep.mubr.f32.mxu0 0.0
        %818 = vmatmul.mubr.f32.gmra.mxu0 %v684
        %v819 = vpop.f32.mrf.mxu0
        %v820 = vadd.f32 %v647, %v819
        %v821 = vpop.f32.mrf.mxu0
        %822 = vmatprep.mubr.f32.mxu0 0.0
        %823 = vmatmul.mubr.f32.gmra.mxu0 %v687
        %v824 = vpop.f32.mrf.mxu0
        %v825 = vadd.f32 %v647, %v824
        %v826 = vpop.f32.mrf.mxu0
        %827 = vmatprep.mubr.f32.mxu0 0.0
        %828 = vmatmul.mubr.f32.gmra.mxu0 %v690
        %v829 = vpop.f32.mrf.mxu0
        %v830 = vadd.f32 %v647, %v829
        %v831 = vpop.f32.mrf.mxu0
        %832 = vmatprep.mubr.f32.mxu0 0.0
        %833 = vmatmul.mubr.f32.gmra.mxu0 %v693
        %v834 = vpop.f32.mrf.mxu0
        %v835 = vadd.f32 %v647, %v834
        %v836 = vpop.f32.mrf.mxu0
        %837 = vmatprep.mubr.f32.mxu0 0.0
        %838 = vmatmul.mubr.f32.gmra.mxu0 %v696
        %v839 = vpop.f32.mrf.mxu0
        %v840 = vadd.f32 %v647, %v839
        %v841 = vpop.f32.mrf.mxu0
        %842 = vdwg.mxu0
        %v843 = vld [vmem:[%s293] sm:$0xf]
        %v844 = vld [vmem:[%s293 + $0x4] sm:$0xf]
        %v845 = vld [vmem:[%s293 + $0x8] sm:$0xf]
        %v846 = vld [vmem:[%s293 + $0xc] sm:$0xf]
        %v847 = vld [vmem:[%s293 + $0x10] sm:$0xf]
        %v848 = vld [vmem:[%s293 + $0x14] sm:$0xf]
        %v849 = vld [vmem:[%s293 + $0x18] sm:$0xf]
        %v850 = vld [vmem:[%s293 + $0x1c] sm:$0xf]
        %v851 = vld [vmem:[%s293 + $0x20] sm:$0xf]
        %v852 = vld [vmem:[%s293 + $0x24] sm:$0xf]
        %v853 = vld [vmem:[%s293 + $0x28] sm:$0xf]
        %v854 = vld [vmem:[%s293 + $0x2c] sm:$0xf]
        %v855 = vld [vmem:[%s293 + $0x30] sm:$0xf]
        %v856 = vld [vmem:[%s293 + $0x34] sm:$0xf]
        %v857 = vld [vmem:[%s293 + $0x38] sm:$0xf]
        %v858 = vld [vmem:[%s293 + $0x3c] sm:$0xf]
        %v859 = vunpack.c.l.bf16 %v843
        %v860 = vunpack.c.l.bf16 %v844
        %v861 = vunpack.c.l.bf16 %v845
        %v862 = vunpack.c.l.bf16 %v846
        %v863 = vunpack.c.l.bf16 %v847
        %v864 = vunpack.c.l.bf16 %v848
        %v865 = vunpack.c.l.bf16 %v849
        %v866 = vunpack.c.l.bf16 %v850
        %v867 = vunpack.c.l.bf16 %v851
        %v868 = vunpack.c.l.bf16 %v852
        %v869 = vunpack.c.l.bf16 %v853
        %v870 = vunpack.c.l.bf16 %v854
        %v871 = vunpack.c.l.bf16 %v855
        %v872 = vunpack.c.l.bf16 %v856
        %v873 = vunpack.c.l.bf16 %v857
        %v874 = vunpack.c.l.bf16 %v858
        %s875 = smul.u32 %s22, 128
        %v876 = vlaneseq
        %v877 = vshrl.u32 %v876, 7
        %v878 = vadd.s32 %v877, 8
        %v879 = vadd.s32 %v877, 16
        %v880 = vadd.s32 %v877, 24
        %v881 = vadd.s32 %v877, 32
        %v882 = vadd.s32 %v877, 40
        %v883 = vadd.s32 %v877, 48
        %v884 = vadd.s32 %v877, 56
        %v885 = vadd.s32 %v877, 64
        %v886 = vadd.s32 %v877, 72
        %v887 = vadd.s32 %v877, 80
        %v888 = vadd.s32 %v877, 88
        %v889 = vadd.s32 %v877, 96
        %v890 = vadd.s32 %v877, 104
        %v891 = vadd.s32 %v877, 112
        %v892 = vadd.s32 %v877, 120
        %v893 = vstv %s875
        %v894 = vadd.s32 %v893, %v877
        %v895 = vadd.s32 %v893, %v878
        %v896 = vadd.s32 %v893, %v879
        %v897 = vadd.s32 %v893, %v880
        %v898 = vadd.s32 %v893, %v881
        %v899 = vadd.s32 %v893, %v882
        %v900 = vadd.s32 %v893, %v883
        %v901 = vadd.s32 %v893, %v884
        %v902 = vadd.s32 %v893, %v885
        %v903 = vadd.s32 %v893, %v886
        %v904 = vadd.s32 %v893, %v887
        %v905 = vadd.s32 %v893, %v888
        %v906 = vadd.s32 %v893, %v889
        %v907 = vadd.s32 %v893, %v890
        %v908 = vadd.s32 %v893, %v891
        %v909 = vadd.s32 %v893, %v892
        %v910 = vlaneseq
        %v911 = vand.u32 %v910, 127
        %v912 = vstv %s625
        %v913 = vadd.s32 %v912, %v911
        %vm914 = vcmp.eq.s32.totalorder %v894, %v913
        %vm915 = vcmp.eq.s32.totalorder %v895, %v913
        %vm916 = vcmp.eq.s32.totalorder %v896, %v913
        %vm917 = vcmp.eq.s32.totalorder %v897, %v913
        %vm918 = vcmp.eq.s32.totalorder %v898, %v913
        %vm919 = vcmp.eq.s32.totalorder %v899, %v913
        %vm920 = vcmp.eq.s32.totalorder %v900, %v913
        %vm921 = vcmp.eq.s32.totalorder %v901, %v913
        %vm922 = vcmp.eq.s32.totalorder %v902, %v913
        %vm923 = vcmp.eq.s32.totalorder %v903, %v913
        %vm924 = vcmp.eq.s32.totalorder %v904, %v913
        %vm925 = vcmp.eq.s32.totalorder %v905, %v913
        %vm926 = vcmp.eq.s32.totalorder %v906, %v913
        %vm927 = vcmp.eq.s32.totalorder %v907, %v913
        %vm928 = vcmp.eq.s32.totalorder %v908, %v913
        %vm929 = vcmp.eq.s32.totalorder %v909, %v913
        %931 = vset.pattern.permute.xlu0 9
        %932 = vperm.xlu0 %931, %v609
        %v933 = vpop.permute.xlu0 %932
        %936 = vset.pattern.permute.xlu0 9
        %937 = vperm.xlu0 %936, %v610
        %v938 = vpop.permute.xlu0 %937
        %941 = vset.pattern.permute.xlu0 9
        %942 = vperm.xlu0 %941, %v611
        %v943 = vpop.permute.xlu0 %942
        %946 = vset.pattern.permute.xlu0 9
        %947 = vperm.xlu0 %946, %v612
        %v948 = vpop.permute.xlu0 %947
        %951 = vset.pattern.permute.xlu0 9
        %952 = vperm.xlu0 %951, %v613
        %v953 = vpop.permute.xlu0 %952
        %956 = vset.pattern.permute.xlu0 9
        %957 = vperm.xlu0 %956, %v614
        %v958 = vpop.permute.xlu0 %957
        %961 = vset.pattern.permute.xlu0 9
        %962 = vperm.xlu0 %961, %v615
        %v963 = vpop.permute.xlu0 %962
        %966 = vset.pattern.permute.xlu0 9
        %967 = vperm.xlu0 %966, %v616
        %v968 = vpop.permute.xlu0 %967
        %971 = vset.pattern.permute.xlu0 9
        %972 = vperm.xlu0 %971, %v617
        %v973 = vpop.permute.xlu0 %972
        %976 = vset.pattern.permute.xlu0 9
        %977 = vperm.xlu0 %976, %v618
        %v978 = vpop.permute.xlu0 %977
        %981 = vset.pattern.permute.xlu0 9
        %982 = vperm.xlu0 %981, %v619
        %v983 = vpop.permute.xlu0 %982
        %986 = vset.pattern.permute.xlu0 9
        %987 = vperm.xlu0 %986, %v620
        %v988 = vpop.permute.xlu0 %987
        %991 = vset.pattern.permute.xlu0 9
        %992 = vperm.xlu0 %991, %v621
        %v993 = vpop.permute.xlu0 %992
        %996 = vset.pattern.permute.xlu0 9
        %997 = vperm.xlu0 %996, %v622
        %v998 = vpop.permute.xlu0 %997
        %1001 = vset.pattern.permute.xlu0 9
        %1002 = vperm.xlu0 %1001, %v623
        %v1003 = vpop.permute.xlu0 %1002
        %1006 = vset.pattern.permute.xlu0 9
        %1007 = vperm.xlu0 %1006, %v624
        %v1008 = vpop.permute.xlu0 %1007
        %v1010 = vsel %vm914, %v933, 0.0
        %v1011 = vsel %vm915, %v938, 0.0
        %v1012 = vsel %vm916, %v943, 0.0
        %v1013 = vsel %vm917, %v948, 0.0
        %v1014 = vsel %vm918, %v953, 0.0
        %v1015 = vsel %vm919, %v958, 0.0
        %v1016 = vsel %vm920, %v963, 0.0
        %v1017 = vsel %vm921, %v968, 0.0
        %v1018 = vsel %vm922, %v973, 0.0
        %v1019 = vsel %vm923, %v978, 0.0
        %v1020 = vsel %vm924, %v983, 0.0
        %v1021 = vsel %vm925, %v988, 0.0
        %v1022 = vsel %vm926, %v993, 0.0
        %v1023 = vsel %vm927, %v998, 0.0
        %v1024 = vsel %vm928, %v1003, 0.0
        %v1025 = vsel %vm929, %v1008, 0.0
        %1026 = vset.pattern.permute.xlu0 8
        %1027 = vperm.xlu0 %1026, %v609
        %v1028 = vpop.permute.xlu0 %1027
        %1030 = vset.pattern.permute.xlu0 8
        %1031 = vperm.xlu0 %1030, %v610
        %v1032 = vpop.permute.xlu0 %1031
        %1034 = vset.pattern.permute.xlu0 8
        %1035 = vperm.xlu0 %1034, %v611
        %v1036 = vpop.permute.xlu0 %1035
        %1038 = vset.pattern.permute.xlu0 8
        %1039 = vperm.xlu0 %1038, %v612
        %v1040 = vpop.permute.xlu0 %1039
        %1042 = vset.pattern.permute.xlu0 8
        %1043 = vperm.xlu0 %1042, %v613
        %v1044 = vpop.permute.xlu0 %1043
        %1046 = vset.pattern.permute.xlu0 8
        %1047 = vperm.xlu0 %1046, %v614
        %v1048 = vpop.permute.xlu0 %1047
        %1050 = vset.pattern.permute.xlu0 8
        %1051 = vperm.xlu0 %1050, %v615
        %v1052 = vpop.permute.xlu0 %1051
        %1054 = vset.pattern.permute.xlu0 8
        %1055 = vperm.xlu0 %1054, %v616
        %v1056 = vpop.permute.xlu0 %1055
        %1058 = vset.pattern.permute.xlu0 8
        %1059 = vperm.xlu0 %1058, %v617
        %v1060 = vpop.permute.xlu0 %1059
        %1062 = vset.pattern.permute.xlu0 8
        %1063 = vperm.xlu0 %1062, %v618
        %v1064 = vpop.permute.xlu0 %1063
        %1066 = vset.pattern.permute.xlu0 8
        %1067 = vperm.xlu0 %1066, %v619
        %v1068 = vpop.permute.xlu0 %1067
        %1070 = vset.pattern.permute.xlu0 8
        %1071 = vperm.xlu0 %1070, %v620
        %v1072 = vpop.permute.xlu0 %1071
        %1074 = vset.pattern.permute.xlu0 8
        %1075 = vperm.xlu0 %1074, %v621
        %v1076 = vpop.permute.xlu0 %1075
        %1078 = vset.pattern.permute.xlu0 8
        %1079 = vperm.xlu0 %1078, %v622
        %v1080 = vpop.permute.xlu0 %1079
        %1082 = vset.pattern.permute.xlu0 8
        %1083 = vperm.xlu0 %1082, %v623
        %v1084 = vpop.permute.xlu0 %1083
        %1086 = vset.pattern.permute.xlu0 8
        %1087 = vperm.xlu0 %1086, %v624
        %v1088 = vpop.permute.xlu0 %1087
        %v1090 = vadd.f32 %v1028, %v1010
        %v1091 = vadd.f32 %v1032, %v1011
        %v1092 = vadd.f32 %v1036, %v1012
        %v1093 = vadd.f32 %v1040, %v1013
        %v1094 = vadd.f32 %v1044, %v1014
        %v1095 = vadd.f32 %v1048, %v1015
        %v1096 = vadd.f32 %v1052, %v1016
        %v1097 = vadd.f32 %v1056, %v1017
        %v1098 = vadd.f32 %v1060, %v1018
        %v1099 = vadd.f32 %v1064, %v1019
        %v1100 = vadd.f32 %v1068, %v1020
        %v1101 = vadd.f32 %v1072, %v1021
        %v1102 = vadd.f32 %v1076, %v1022
        %v1103 = vadd.f32 %v1080, %v1023
        %v1104 = vadd.f32 %v1084, %v1024
        %v1105 = vadd.f32 %v1088, %v1025
        %v1106 = vmul.f32 %v859, %v1090
        %v1107 = vmul.f32 %v860, %v1091
        %v1108 = vmul.f32 %v861, %v1092
        %v1109 = vmul.f32 %v862, %v1093
        %v1110 = vmul.f32 %v863, %v1094
        %v1111 = vmul.f32 %v864, %v1095
        %v1112 = vmul.f32 %v865, %v1096
        %v1113 = vmul.f32 %v866, %v1097
        %v1114 = vmul.f32 %v867, %v1098
        %v1115 = vmul.f32 %v868, %v1099
        %v1116 = vmul.f32 %v869, %v1100
        %v1117 = vmul.f32 %v870, %v1101
        %v1118 = vmul.f32 %v871, %v1102
        %v1119 = vmul.f32 %v872, %v1103
        %v1120 = vmul.f32 %v873, %v1104
        %v1121 = vmul.f32 %v874, %v1105
        %vm1122 = vcmp.ge.f32.partialorder %v1106, 0.0
        %vm1123 = vcmp.ge.f32.partialorder %v1107, 0.0
        %vm1124 = vcmp.ge.f32.partialorder %v1108, 0.0
        %vm1125 = vcmp.ge.f32.partialorder %v1109, 0.0
        %vm1126 = vcmp.ge.f32.partialorder %v1110, 0.0
        %vm1127 = vcmp.ge.f32.partialorder %v1111, 0.0
        %vm1128 = vcmp.ge.f32.partialorder %v1112, 0.0
        %vm1129 = vcmp.ge.f32.partialorder %v1113, 0.0
        %vm1130 = vcmp.ge.f32.partialorder %v1114, 0.0
        %vm1131 = vcmp.ge.f32.partialorder %v1115, 0.0
        %vm1132 = vcmp.ge.f32.partialorder %v1116, 0.0
        %vm1133 = vcmp.ge.f32.partialorder %v1117, 0.0
        %vm1134 = vcmp.ge.f32.partialorder %v1118, 0.0
        %vm1135 = vcmp.ge.f32.partialorder %v1119, 0.0
        %vm1136 = vcmp.ge.f32.partialorder %v1120, 0.0
        %vm1137 = vcmp.ge.f32.partialorder %v1121, 0.0
        %v1138 = vmul.f32 %v1106, 0.01
        %v1139 = vmul.f32 %v1107, 0.01
        %v1140 = vmul.f32 %v1108, 0.01
        %v1141 = vmul.f32 %v1109, 0.01
        %v1142 = vmul.f32 %v1110, 0.01
        %v1143 = vmul.f32 %v1111, 0.01
        %v1144 = vmul.f32 %v1112, 0.01
        %v1145 = vmul.f32 %v1113, 0.01
        %v1146 = vmul.f32 %v1114, 0.01
        %v1147 = vmul.f32 %v1115, 0.01
        %v1148 = vmul.f32 %v1116, 0.01
        %v1149 = vmul.f32 %v1117, 0.01
        %v1150 = vmul.f32 %v1118, 0.01
        %v1151 = vmul.f32 %v1119, 0.01
        %v1152 = vmul.f32 %v1120, 0.01
        %v1153 = vmul.f32 %v1121, 0.01
        %v1154 = vsel %vm1122, %v1106, %v1138
        %v1155 = vsel %vm1123, %v1107, %v1139
        %v1156 = vsel %vm1124, %v1108, %v1140
        %v1157 = vsel %vm1125, %v1109, %v1141
        %v1158 = vsel %vm1126, %v1110, %v1142
        %v1159 = vsel %vm1127, %v1111, %v1143
        %v1160 = vsel %vm1128, %v1112, %v1144
        %v1161 = vsel %vm1129, %v1113, %v1145
        %v1162 = vsel %vm1130, %v1114, %v1146
        %v1163 = vsel %vm1131, %v1115, %v1147
        %v1164 = vsel %vm1132, %v1116, %v1148
        %v1165 = vsel %vm1133, %v1117, %v1149
        %v1166 = vsel %vm1134, %v1118, %v1150
        %v1167 = vsel %vm1135, %v1119, %v1151
        %v1168 = vsel %vm1136, %v1120, %v1152
        %v1169 = vsel %vm1137, %v1121, %v1153
        %vm1170 = vcmp.lt.s32.totalorder %v913, 200
        %v1171 = vsel %vm1170, %v1154, -1e+30
        %v1172 = vsel %vm1170, %v1155, -1e+30
        %v1173 = vsel %vm1170, %v1156, -1e+30
        %v1174 = vsel %vm1170, %v1157, -1e+30
        %v1175 = vsel %vm1170, %v1158, -1e+30
        %v1176 = vsel %vm1170, %v1159, -1e+30
        %v1177 = vsel %vm1170, %v1160, -1e+30
        %v1178 = vsel %vm1170, %v1161, -1e+30
        %v1179 = vsel %vm1170, %v1162, -1e+30
        %v1180 = vsel %vm1170, %v1163, -1e+30
        %v1181 = vsel %vm1170, %v1164, -1e+30
        %v1182 = vsel %vm1170, %v1165, -1e+30
        %v1183 = vsel %vm1170, %v1166, -1e+30
        %v1184 = vsel %vm1170, %v1167, -1e+30
        %v1185 = vsel %vm1170, %v1168, -1e+30
        %v1186 = vsel %vm1170, %v1169, -1e+30
        %v1187 = vld [vmem:[#allocation2] sm:$0xff]
        %v1188 = vld [vmem:[#allocation2 + $0x8] sm:$0xff]
        %v1189 = vld [vmem:[#allocation2 + $0x10] sm:$0xff]
        %v1190 = vld [vmem:[#allocation2 + $0x18] sm:$0xff]
        %v1191 = vld [vmem:[#allocation2 + $0x20] sm:$0xff]
        %v1192 = vld [vmem:[#allocation2 + $0x28] sm:$0xff]
        %v1193 = vld [vmem:[#allocation2 + $0x30] sm:$0xff]
        %v1194 = vld [vmem:[#allocation2 + $0x38] sm:$0xff]
        %v1195 = vld [vmem:[#allocation2 + $0x40] sm:$0xff]
        %v1196 = vld [vmem:[#allocation2 + $0x48] sm:$0xff]
        %v1197 = vld [vmem:[#allocation2 + $0x50] sm:$0xff]
        %v1198 = vld [vmem:[#allocation2 + $0x58] sm:$0xff]
        %v1199 = vld [vmem:[#allocation2 + $0x60] sm:$0xff]
        %v1200 = vld [vmem:[#allocation2 + $0x68] sm:$0xff]
        %v1201 = vld [vmem:[#allocation2 + $0x70] sm:$0xff]
        %v1202 = vld [vmem:[#allocation2 + $0x78] sm:$0xff]
        %1203 = vmax.xlane.f32.xlu0 %v1171
        %v1204 = vpop.xlane.xlu0 %1203
        %1205 = vmax.xlane.f32.xlu0 %v1172
        %v1206 = vpop.xlane.xlu0 %1205
        %1207 = vmax.xlane.f32.xlu0 %v1173
        %v1208 = vpop.xlane.xlu0 %1207
        %1209 = vmax.xlane.f32.xlu0 %v1174
        %v1210 = vpop.xlane.xlu0 %1209
        %1211 = vmax.xlane.f32.xlu0 %v1175
        %v1212 = vpop.xlane.xlu0 %1211
        %1213 = vmax.xlane.f32.xlu0 %v1176
        %v1214 = vpop.xlane.xlu0 %1213
        %1215 = vmax.xlane.f32.xlu0 %v1177
        %v1216 = vpop.xlane.xlu0 %1215
        %1217 = vmax.xlane.f32.xlu0 %v1178
        %v1218 = vpop.xlane.xlu0 %1217
        %1219 = vmax.xlane.f32.xlu0 %v1179
        %v1220 = vpop.xlane.xlu0 %1219
        %1221 = vmax.xlane.f32.xlu0 %v1180
        %v1222 = vpop.xlane.xlu0 %1221
        %1223 = vmax.xlane.f32.xlu0 %v1181
        %v1224 = vpop.xlane.xlu0 %1223
        %1225 = vmax.xlane.f32.xlu0 %v1182
        %v1226 = vpop.xlane.xlu0 %1225
        %1227 = vmax.xlane.f32.xlu0 %v1183
        %v1228 = vpop.xlane.xlu0 %1227
        %1229 = vmax.xlane.f32.xlu0 %v1184
        %v1230 = vpop.xlane.xlu0 %1229
        %1231 = vmax.xlane.f32.xlu0 %v1185
        %v1232 = vpop.xlane.xlu0 %1231
        %1233 = vmax.xlane.f32.xlu0 %v1186
        %v1234 = vpop.xlane.xlu0 %1233
        %v1235 = vmax.f32 %v1187, %v1204
        %v1236 = vmax.f32 %v1188, %v1206
        %v1237 = vmax.f32 %v1189, %v1208
        %v1238 = vmax.f32 %v1190, %v1210
        %v1239 = vmax.f32 %v1191, %v1212
        %v1240 = vmax.f32 %v1192, %v1214
        %v1241 = vmax.f32 %v1193, %v1216
        %v1242 = vmax.f32 %v1194, %v1218
        %v1243 = vmax.f32 %v1195, %v1220
        %v1244 = vmax.f32 %v1196, %v1222
        %v1245 = vmax.f32 %v1197, %v1224
        %v1246 = vmax.f32 %v1198, %v1226
        %v1247 = vmax.f32 %v1199, %v1228
        %v1248 = vmax.f32 %v1200, %v1230
        %v1249 = vmax.f32 %v1201, %v1232
        %v1250 = vmax.f32 %v1202, %v1234
        %v1251 = vsub.f32 %v1187, %v1235
        %v1252 = vsub.f32 %v1188, %v1236
        %v1253 = vsub.f32 %v1189, %v1237
        %v1254 = vsub.f32 %v1190, %v1238
        %v1255 = vsub.f32 %v1191, %v1239
        %v1256 = vsub.f32 %v1192, %v1240
        %v1257 = vsub.f32 %v1193, %v1241
        %v1258 = vsub.f32 %v1194, %v1242
        %v1259 = vsub.f32 %v1195, %v1243
        %v1260 = vsub.f32 %v1196, %v1244
        %v1261 = vsub.f32 %v1197, %v1245
        %v1262 = vsub.f32 %v1198, %v1246
        %v1263 = vsub.f32 %v1199, %v1247
        %v1264 = vsub.f32 %v1200, %v1248
        %v1265 = vsub.f32 %v1201, %v1249
        %v1266 = vsub.f32 %v1202, %v1250
        %v1267 = vmul.f32 %v1251, 1.442695
        %v1268 = vpow.pop %v1267
        %v1269 = vmul.f32 %v1252, 1.442695
        %v1270 = vpow.pop %v1269
        %v1271 = vmul.f32 %v1253, 1.442695
        %v1272 = vpow.pop %v1271
        %v1273 = vmul.f32 %v1254, 1.442695
        %v1274 = vpow.pop %v1273
        %v1275 = vmul.f32 %v1255, 1.442695
        %v1276 = vpow.pop %v1275
        %v1277 = vmul.f32 %v1256, 1.442695
        %v1278 = vpow.pop %v1277
        %v1279 = vmul.f32 %v1257, 1.442695
        %v1280 = vpow.pop %v1279
        %v1281 = vmul.f32 %v1258, 1.442695
        %v1282 = vpow.pop %v1281
        %v1283 = vmul.f32 %v1259, 1.442695
        %v1284 = vpow.pop %v1283
        %v1285 = vmul.f32 %v1260, 1.442695
        %v1286 = vpow.pop %v1285
        %v1287 = vmul.f32 %v1261, 1.442695
        %v1288 = vpow.pop %v1287
        %v1289 = vmul.f32 %v1262, 1.442695
        %v1290 = vpow.pop %v1289
        %v1291 = vmul.f32 %v1263, 1.442695
        %v1292 = vpow.pop %v1291
        %v1293 = vmul.f32 %v1264, 1.442695
        %v1294 = vpow.pop %v1293
        %v1295 = vmul.f32 %v1265, 1.442695
        %v1296 = vpow.pop %v1295
        %v1297 = vmul.f32 %v1266, 1.442695
        %v1298 = vpow.pop %v1297
        %1300 = vset.pattern.permute.xlu0 0
        %1301 = vperm.xlu0 %1300, %v1235
        %v1302 = vpop.permute.xlu0 %1301
        %1305 = vset.pattern.permute.xlu0 0
        %1306 = vperm.xlu0 %1305, %v1236
        %v1307 = vpop.permute.xlu0 %1306
        %1310 = vset.pattern.permute.xlu0 0
        %1311 = vperm.xlu0 %1310, %v1237
        %v1312 = vpop.permute.xlu0 %1311
        %1315 = vset.pattern.permute.xlu0 0
        %1316 = vperm.xlu0 %1315, %v1238
        %v1317 = vpop.permute.xlu0 %1316
        %1320 = vset.pattern.permute.xlu0 0
        %1321 = vperm.xlu0 %1320, %v1239
        %v1322 = vpop.permute.xlu0 %1321
        %1325 = vset.pattern.permute.xlu0 0
        %1326 = vperm.xlu0 %1325, %v1240
        %v1327 = vpop.permute.xlu0 %1326
        %1330 = vset.pattern.permute.xlu0 0
        %1331 = vperm.xlu0 %1330, %v1241
        %v1332 = vpop.permute.xlu0 %1331
        %1335 = vset.pattern.permute.xlu0 0
        %1336 = vperm.xlu0 %1335, %v1242
        %v1337 = vpop.permute.xlu0 %1336
        %1340 = vset.pattern.permute.xlu0 0
        %1341 = vperm.xlu0 %1340, %v1243
        %v1342 = vpop.permute.xlu0 %1341
        %1345 = vset.pattern.permute.xlu0 0
        %1346 = vperm.xlu0 %1345, %v1244
        %v1347 = vpop.permute.xlu0 %1346
        %1350 = vset.pattern.permute.xlu0 0
        %1351 = vperm.xlu0 %1350, %v1245
        %v1352 = vpop.permute.xlu0 %1351
        %1355 = vset.pattern.permute.xlu0 0
        %1356 = vperm.xlu0 %1355, %v1246
        %v1357 = vpop.permute.xlu0 %1356
        %1360 = vset.pattern.permute.xlu0 0
        %1361 = vperm.xlu0 %1360, %v1247
        %v1362 = vpop.permute.xlu0 %1361
        %1365 = vset.pattern.permute.xlu0 0
        %1366 = vperm.xlu0 %1365, %v1248
        %v1367 = vpop.permute.xlu0 %1366
        %1370 = vset.pattern.permute.xlu0 0
        %1371 = vperm.xlu0 %1370, %v1249
        %v1372 = vpop.permute.xlu0 %1371
        %1375 = vset.pattern.permute.xlu0 0
        %1376 = vperm.xlu0 %1375, %v1250
        %v1377 = vpop.permute.xlu0 %1376
        %v1379 = vsub.f32 %v1171, %v1302
        %v1380 = vsub.f32 %v1172, %v1307
        %v1381 = vsub.f32 %v1173, %v1312
        %v1382 = vsub.f32 %v1174, %v1317
        %v1383 = vsub.f32 %v1175, %v1322
        %v1384 = vsub.f32 %v1176, %v1327
        %v1385 = vsub.f32 %v1177, %v1332
        %v1386 = vsub.f32 %v1178, %v1337
        %v1387 = vsub.f32 %v1179, %v1342
        %v1388 = vsub.f32 %v1180, %v1347
        %v1389 = vsub.f32 %v1181, %v1352
        %v1390 = vsub.f32 %v1182, %v1357
        %v1391 = vsub.f32 %v1183, %v1362
        %v1392 = vsub.f32 %v1184, %v1367
        %v1393 = vsub.f32 %v1185, %v1372
        %v1394 = vsub.f32 %v1186, %v1377
        %v1395 = vmul.f32 %v1379, 1.442695
        %v1396 = vpow.pop %v1395
        %v1397 = vmul.f32 %v1380, 1.442695
        %v1398 = vpow.pop %v1397
        %v1399 = vmul.f32 %v1381, 1.442695
        %v1400 = vpow.pop %v1399
        %v1401 = vmul.f32 %v1382, 1.442695
        %v1402 = vpow.pop %v1401
        %v1403 = vmul.f32 %v1383, 1.442695
        %v1404 = vpow.pop %v1403
        %v1405 = vmul.f32 %v1384, 1.442695
        %v1406 = vpow.pop %v1405
        %v1407 = vmul.f32 %v1385, 1.442695
        %v1408 = vpow.pop %v1407
        %v1409 = vmul.f32 %v1386, 1.442695
        %v1410 = vpow.pop %v1409
        %v1411 = vmul.f32 %v1387, 1.442695
        %v1412 = vpow.pop %v1411
        %v1413 = vmul.f32 %v1388, 1.442695
        %v1414 = vpow.pop %v1413
        %v1415 = vmul.f32 %v1389, 1.442695
        %v1416 = vpow.pop %v1415
        %v1417 = vmul.f32 %v1390, 1.442695
        %v1418 = vpow.pop %v1417
        %v1419 = vmul.f32 %v1391, 1.442695
        %v1420 = vpow.pop %v1419
        %v1421 = vmul.f32 %v1392, 1.442695
        %v1422 = vpow.pop %v1421
        %v1423 = vmul.f32 %v1393, 1.442695
        %v1424 = vpow.pop %v1423
        %v1425 = vmul.f32 %v1394, 1.442695
        %v1426 = vpow.pop %v1425
        %v1427 = vld [vmem:[#allocation3] sm:$0xff]
        %v1428 = vld [vmem:[#allocation3 + $0x8] sm:$0xff]
        %v1429 = vld [vmem:[#allocation3 + $0x10] sm:$0xff]
        %v1430 = vld [vmem:[#allocation3 + $0x18] sm:$0xff]
        %v1431 = vld [vmem:[#allocation3 + $0x20] sm:$0xff]
        %v1432 = vld [vmem:[#allocation3 + $0x28] sm:$0xff]
        %v1433 = vld [vmem:[#allocation3 + $0x30] sm:$0xff]
        %v1434 = vld [vmem:[#allocation3 + $0x38] sm:$0xff]
        %v1435 = vld [vmem:[#allocation3 + $0x40] sm:$0xff]
        %v1436 = vld [vmem:[#allocation3 + $0x48] sm:$0xff]
        %v1437 = vld [vmem:[#allocation3 + $0x50] sm:$0xff]
        %v1438 = vld [vmem:[#allocation3 + $0x58] sm:$0xff]
        %v1439 = vld [vmem:[#allocation3 + $0x60] sm:$0xff]
        %v1440 = vld [vmem:[#allocation3 + $0x68] sm:$0xff]
        %v1441 = vld [vmem:[#allocation3 + $0x70] sm:$0xff]
        %v1442 = vld [vmem:[#allocation3 + $0x78] sm:$0xff]
        %v1443 = vmul.f32 %v1268, %v1427
        %v1444 = vmul.f32 %v1270, %v1428
        %v1445 = vmul.f32 %v1272, %v1429
        %v1446 = vmul.f32 %v1274, %v1430
        %v1447 = vmul.f32 %v1276, %v1431
        %v1448 = vmul.f32 %v1278, %v1432
        %v1449 = vmul.f32 %v1280, %v1433
        %v1450 = vmul.f32 %v1282, %v1434
        %v1451 = vmul.f32 %v1284, %v1435
        %v1452 = vmul.f32 %v1286, %v1436
        %v1453 = vmul.f32 %v1288, %v1437
        %v1454 = vmul.f32 %v1290, %v1438
        %v1455 = vmul.f32 %v1292, %v1439
        %v1456 = vmul.f32 %v1294, %v1440
        %v1457 = vmul.f32 %v1296, %v1441
        %v1458 = vmul.f32 %v1298, %v1442
        %1459 = vadd.xlane.f32.xlu0 %v1396
        %v1460 = vpop.xlane.xlu0 %1459
        %1461 = vadd.xlane.f32.xlu0 %v1398
        %v1462 = vpop.xlane.xlu0 %1461
        %1463 = vadd.xlane.f32.xlu0 %v1400
        %v1464 = vpop.xlane.xlu0 %1463
        %1465 = vadd.xlane.f32.xlu0 %v1402
        %v1466 = vpop.xlane.xlu0 %1465
        %1467 = vadd.xlane.f32.xlu0 %v1404
        %v1468 = vpop.xlane.xlu0 %1467
        %1469 = vadd.xlane.f32.xlu0 %v1406
        %v1470 = vpop.xlane.xlu0 %1469
        %1471 = vadd.xlane.f32.xlu0 %v1408
        %v1472 = vpop.xlane.xlu0 %1471
        %1473 = vadd.xlane.f32.xlu0 %v1410
        %v1474 = vpop.xlane.xlu0 %1473
        %1475 = vadd.xlane.f32.xlu0 %v1412
        %v1476 = vpop.xlane.xlu0 %1475
        %1477 = vadd.xlane.f32.xlu0 %v1414
        %v1478 = vpop.xlane.xlu0 %1477
        %1479 = vadd.xlane.f32.xlu0 %v1416
        %v1480 = vpop.xlane.xlu0 %1479
        %1481 = vadd.xlane.f32.xlu0 %v1418
        %v1482 = vpop.xlane.xlu0 %1481
        %1483 = vadd.xlane.f32.xlu0 %v1420
        %v1484 = vpop.xlane.xlu0 %1483
        %1485 = vadd.xlane.f32.xlu0 %v1422
        %v1486 = vpop.xlane.xlu0 %1485
        %1487 = vadd.xlane.f32.xlu0 %v1424
        %v1488 = vpop.xlane.xlu0 %1487
        %1489 = vadd.xlane.f32.xlu0 %v1426
        %v1490 = vpop.xlane.xlu0 %1489
        %v1491 = vadd.f32 %v1443, %v1460
        %v1492 = vadd.f32 %v1444, %v1462
        %v1493 = vadd.f32 %v1445, %v1464
        %v1494 = vadd.f32 %v1446, %v1466
        %v1495 = vadd.f32 %v1447, %v1468
        %v1496 = vadd.f32 %v1448, %v1470
        %v1497 = vadd.f32 %v1449, %v1472
        %v1498 = vadd.f32 %v1450, %v1474
        %v1499 = vadd.f32 %v1451, %v1476
        %v1500 = vadd.f32 %v1452, %v1478
        %v1501 = vadd.f32 %v1453, %v1480
        %v1502 = vadd.f32 %v1454, %v1482
        %v1503 = vadd.f32 %v1455, %v1484
        %v1504 = vadd.f32 %v1456, %v1486
        %v1505 = vadd.f32 %v1457, %v1488
        %v1506 = vadd.f32 %v1458, %v1490
        %vm1507 = vcmask 7168
        %1508 = vst.msk [vmem:[#allocation3] sm:$0xff] %vm1507, %v1491
        %1509 = vst.msk [vmem:[#allocation3 + $0x8] sm:$0xff] %vm1507, %v1492
        %1510 = vst.msk [vmem:[#allocation3 + $0x10] sm:$0xff] %vm1507, %v1493
        %1511 = vst.msk [vmem:[#allocation3 + $0x18] sm:$0xff] %vm1507, %v1494
        %1512 = vst.msk [vmem:[#allocation3 + $0x20] sm:$0xff] %vm1507, %v1495
        %1513 = vst.msk [vmem:[#allocation3 + $0x28] sm:$0xff] %vm1507, %v1496
        %1514 = vst.msk [vmem:[#allocation3 + $0x30] sm:$0xff] %vm1507, %v1497
        %1515 = vst.msk [vmem:[#allocation3 + $0x38] sm:$0xff] %vm1507, %v1498
        %1516 = vst.msk [vmem:[#allocation3 + $0x40] sm:$0xff] %vm1507, %v1499
        %1517 = vst.msk [vmem:[#allocation3 + $0x48] sm:$0xff] %vm1507, %v1500
        %1518 = vst.msk [vmem:[#allocation3 + $0x50] sm:$0xff] %vm1507, %v1501
        %1519 = vst.msk [vmem:[#allocation3 + $0x58] sm:$0xff] %vm1507, %v1502
        %1520 = vst.msk [vmem:[#allocation3 + $0x60] sm:$0xff] %vm1507, %v1503
        %1521 = vst.msk [vmem:[#allocation3 + $0x68] sm:$0xff] %vm1507, %v1504
        %1522 = vst.msk [vmem:[#allocation3 + $0x70] sm:$0xff] %vm1507, %v1505
        %1523 = vst.msk [vmem:[#allocation3 + $0x78] sm:$0xff] %vm1507, %v1506
        %v1524 = vpack.c.bf16 %v1398, %v1396
        %v1525 = vpack.c.bf16 %v1402, %v1400
        %v1526 = vpack.c.bf16 %v1406, %v1404
        %v1527 = vpack.c.bf16 %v1410, %v1408
        %v1528 = vpack.c.bf16 %v1414, %v1412
        %v1529 = vpack.c.bf16 %v1418, %v1416
        %v1530 = vpack.c.bf16 %v1422, %v1420
        %v1531 = vpack.c.bf16 %v1426, %v1424
        %v1532 = vpack.c.bf16 %v770, %v765
        %v1533 = vpack.c.bf16 %v780, %v775
        %v1534 = vpack.c.bf16 %v790, %v785
        %v1535 = vpack.c.bf16 %v800, %v795
        %v1536 = vpack.c.bf16 %v810, %v805
        %v1537 = vpack.c.bf16 %v820, %v815
        %v1538 = vpack.c.bf16 %v830, %v825
        %v1539 = vpack.c.bf16 %v840, %v835
        %1540 = vmatprep.subr.bf16.mxu0 0
        %1541 = vmatpush1.bf16.msra.mxu0 %v1539
        %1542 = vmatprep.subr.bf16.mxu0 0
        %1543 = vmatpush1.bf16.msra.mxu0 %v1538
        %1544 = vmatprep.subr.bf16.mxu0 0
        %1545 = vmatpush1.bf16.msra.mxu0 %v1537
        %1546 = vmatprep.subr.bf16.mxu0 0
        %1547 = vmatpush1.bf16.msra.mxu0 %v1536
        %1548 = vmatprep.subr.bf16.mxu0 0
        %1549 = vmatpush1.bf16.msra.mxu0 %v1535
        %1550 = vmatprep.subr.bf16.mxu0 0
        %1551 = vmatpush1.bf16.msra.mxu0 %v1534
        %1552 = vmatprep.subr.bf16.mxu0 0
        %1553 = vmatpush1.bf16.msra.mxu0 %v1533
        %1554 = vmatprep.subr.bf16.mxu0 0
        %1555 = vmatpush1.bf16.msra.mxu0 %v1532
        %1556 = vmatprep.subr.bf16.mxu0 0
        %1557 = vmatpush2.bf16.msra.mxu0 0
        %1558 = vmatprep.subr.bf16.mxu0 0
        %1559 = vmatpush2.bf16.msra.mxu0 0
        %1560 = vmatprep.subr.bf16.mxu0 0
        %1561 = vmatpush2.bf16.msra.mxu0 0
        %1562 = vmatprep.subr.bf16.mxu0 0
        %1563 = vmatpush2.bf16.msra.mxu0 0
        %1564 = vmatprep.subr.bf16.mxu0 0
        %1565 = vmatpush2.bf16.msra.mxu0 0
        %1566 = vmatprep.subr.bf16.mxu0 0
        %1567 = vmatpush2.bf16.msra.mxu0 0
        %1568 = vmatprep.subr.bf16.mxu0 0
        %1569 = vmatpush2.bf16.msra.mxu0 0
        %1570 = vmatprep.subr.bf16.mxu0 0
        %1571 = vmatpush2.bf16.msra.mxu0 0
        %1572 = vmatprep.mubr.bf16.mxu0 0
        %1573 = vmatmul.mubr.bf16.gmra.mxu0 %v1524
        %v1574 = vpop.f32.mrf.mxu0
        %v1575 = vadd.f32 0.0, %v1574
        %v1576 = vpop.f32.mrf.mxu0
        %v1577 = vpop.f32.mrf.mxu0
        %v1578 = vadd.f32 0.0, %v1577
        %v1579 = vpop.f32.mrf.mxu0
        %1580 = vmatprep.mubr.bf16.mxu0 0
        %1581 = vmatmul.mubr.bf16.gmra.mxu0 %v1525
        %v1582 = vpop.f32.mrf.mxu0
        %v1583 = vadd.f32 0.0, %v1582
        %v1584 = vpop.f32.mrf.mxu0
        %v1585 = vpop.f32.mrf.mxu0
        %v1586 = vadd.f32 0.0, %v1585
        %v1587 = vpop.f32.mrf.mxu0
        %1588 = vmatprep.mubr.bf16.mxu0 0
        %1589 = vmatmul.mubr.bf16.gmra.mxu0 %v1526
        %v1590 = vpop.f32.mrf.mxu0
        %v1591 = vadd.f32 0.0, %v1590
        %v1592 = vpop.f32.mrf.mxu0
        %v1593 = vpop.f32.mrf.mxu0
        %v1594 = vadd.f32 0.0, %v1593
        %v1595 = vpop.f32.mrf.mxu0
        %1596 = vmatprep.mubr.bf16.mxu0 0
        %1597 = vmatmul.mubr.bf16.gmra.mxu0 %v1527
        %v1598 = vpop.f32.mrf.mxu0
        %v1599 = vadd.f32 0.0, %v1598
        %v1600 = vpop.f32.mrf.mxu0
        %v1601 = vpop.f32.mrf.mxu0
        %v1602 = vadd.f32 0.0, %v1601
        %v1603 = vpop.f32.mrf.mxu0
        %1604 = vmatprep.mubr.bf16.mxu0 0
        %1605 = vmatmul.mubr.bf16.gmra.mxu0 %v1528
        %v1606 = vpop.f32.mrf.mxu0
        %v1607 = vadd.f32 0.0, %v1606
        %v1608 = vpop.f32.mrf.mxu0
        %v1609 = vpop.f32.mrf.mxu0
        %v1610 = vadd.f32 0.0, %v1609
        %v1611 = vpop.f32.mrf.mxu0
        %1612 = vmatprep.mubr.bf16.mxu0 0
        %1613 = vmatmul.mubr.bf16.gmra.mxu0 %v1529
        %v1614 = vpop.f32.mrf.mxu0
        %v1615 = vadd.f32 0.0, %v1614
        %v1616 = vpop.f32.mrf.mxu0
        %v1617 = vpop.f32.mrf.mxu0
        %v1618 = vadd.f32 0.0, %v1617
        %v1619 = vpop.f32.mrf.mxu0
        %1620 = vmatprep.mubr.bf16.mxu0 0
        %1621 = vmatmul.mubr.bf16.gmra.mxu0 %v1530
        %v1622 = vpop.f32.mrf.mxu0
        %v1623 = vadd.f32 0.0, %v1622
        %v1624 = vpop.f32.mrf.mxu0
        %v1625 = vpop.f32.mrf.mxu0
        %v1626 = vadd.f32 0.0, %v1625
        %v1627 = vpop.f32.mrf.mxu0
        %1628 = vmatprep.mubr.bf16.mxu0 0
        %1629 = vmatmul.mubr.bf16.gmra.mxu0 %v1531
        %v1630 = vpop.f32.mrf.mxu0
        %v1631 = vadd.f32 0.0, %v1630
        %v1632 = vpop.f32.mrf.mxu0
        %v1633 = vpop.f32.mrf.mxu0
        %v1634 = vadd.f32 0.0, %v1633
        %v1635 = vpop.f32.mrf.mxu0
        %1636 = vdwg.mxu0
        %v1637 = vld [vmem:[#allocation4] sm:$0xff]
        %v1638 = vld [vmem:[#allocation4 + $0x8] sm:$0xff]
        %v1639 = vld [vmem:[#allocation4 + $0x10] sm:$0xff]
        %v1640 = vld [vmem:[#allocation4 + $0x18] sm:$0xff]
        %v1641 = vld [vmem:[#allocation4 + $0x20] sm:$0xff]
        %v1642 = vld [vmem:[#allocation4 + $0x28] sm:$0xff]
        %v1643 = vld [vmem:[#allocation4 + $0x30] sm:$0xff]
        %v1644 = vld [vmem:[#allocation4 + $0x38] sm:$0xff]
        %v1645 = vld [vmem:[#allocation4 + $0x40] sm:$0xff]
        %v1646 = vld [vmem:[#allocation4 + $0x48] sm:$0xff]
        %v1647 = vld [vmem:[#allocation4 + $0x50] sm:$0xff]
        %v1648 = vld [vmem:[#allocation4 + $0x58] sm:$0xff]
        %v1649 = vld [vmem:[#allocation4 + $0x60] sm:$0xff]
        %v1650 = vld [vmem:[#allocation4 + $0x68] sm:$0xff]
        %v1651 = vld [vmem:[#allocation4 + $0x70] sm:$0xff]
        %v1652 = vld [vmem:[#allocation4 + $0x78] sm:$0xff]
        %1654 = vset.pattern.permute.xlu0 0
        %1655 = vperm.xlu0 %1654, %v1268
        %v1656 = vpop.permute.xlu0 %1655
        %1659 = vset.pattern.permute.xlu0 0
        %1660 = vperm.xlu0 %1659, %v1270
        %v1661 = vpop.permute.xlu0 %1660
        %1664 = vset.pattern.permute.xlu0 0
        %1665 = vperm.xlu0 %1664, %v1272
        %v1666 = vpop.permute.xlu0 %1665
        %1669 = vset.pattern.permute.xlu0 0
        %1670 = vperm.xlu0 %1669, %v1274
        %v1671 = vpop.permute.xlu0 %1670
        %1674 = vset.pattern.permute.xlu0 0
        %1675 = vperm.xlu0 %1674, %v1276
        %v1676 = vpop.permute.xlu0 %1675
        %1679 = vset.pattern.permute.xlu0 0
        %1680 = vperm.xlu0 %1679, %v1278
        %v1681 = vpop.permute.xlu0 %1680
        %1684 = vset.pattern.permute.xlu0 0
        %1685 = vperm.xlu0 %1684, %v1280
        %v1686 = vpop.permute.xlu0 %1685
        %1689 = vset.pattern.permute.xlu0 0
        %1690 = vperm.xlu0 %1689, %v1282
        %v1691 = vpop.permute.xlu0 %1690
        %1694 = vset.pattern.permute.xlu0 0
        %1695 = vperm.xlu0 %1694, %v1284
        %v1696 = vpop.permute.xlu0 %1695
        %1699 = vset.pattern.permute.xlu0 0
        %1700 = vperm.xlu0 %1699, %v1286
        %v1701 = vpop.permute.xlu0 %1700
        %1704 = vset.pattern.permute.xlu0 0
        %1705 = vperm.xlu0 %1704, %v1288
        %v1706 = vpop.permute.xlu0 %1705
        %1709 = vset.pattern.permute.xlu0 0
        %1710 = vperm.xlu0 %1709, %v1290
        %v1711 = vpop.permute.xlu0 %1710
        %1714 = vset.pattern.permute.xlu0 0
        %1715 = vperm.xlu0 %1714, %v1292
        %v1716 = vpop.permute.xlu0 %1715
        %1719 = vset.pattern.permute.xlu0 0
        %1720 = vperm.xlu0 %1719, %v1294
        %v1721 = vpop.permute.xlu0 %1720
        %1724 = vset.pattern.permute.xlu0 0
        %1725 = vperm.xlu0 %1724, %v1296
        %v1726 = vpop.permute.xlu0 %1725
        %1729 = vset.pattern.permute.xlu0 0
        %1730 = vperm.xlu0 %1729, %v1298
        %v1731 = vpop.permute.xlu0 %1730
        %v1733 = vmul.f32 %v1656, %v1637
        %v1734 = vmul.f32 %v1661, %v1638
        %v1735 = vmul.f32 %v1666, %v1639
        %v1736 = vmul.f32 %v1671, %v1640
        %v1737 = vmul.f32 %v1676, %v1641
        %v1738 = vmul.f32 %v1681, %v1642
        %v1739 = vmul.f32 %v1686, %v1643
        %v1740 = vmul.f32 %v1691, %v1644
        %v1741 = vmul.f32 %v1696, %v1645
        %v1742 = vmul.f32 %v1701, %v1646
        %v1743 = vmul.f32 %v1706, %v1647
        %v1744 = vmul.f32 %v1711, %v1648
        %v1745 = vmul.f32 %v1716, %v1649
        %v1746 = vmul.f32 %v1721, %v1650
        %v1747 = vmul.f32 %v1726, %v1651
        %v1748 = vmul.f32 %v1731, %v1652
        %v1749 = vadd.f32 %v1733, %v1575
        %v1750 = vadd.f32 %v1734, %v1578
        %v1751 = vadd.f32 %v1735, %v1583
        %v1752 = vadd.f32 %v1736, %v1586
        %v1753 = vadd.f32 %v1737, %v1591
        %v1754 = vadd.f32 %v1738, %v1594
        %v1755 = vadd.f32 %v1739, %v1599
        %v1756 = vadd.f32 %v1740, %v1602
        %v1757 = vadd.f32 %v1741, %v1607
        %v1758 = vadd.f32 %v1742, %v1610
        %v1759 = vadd.f32 %v1743, %v1615
        %v1760 = vadd.f32 %v1744, %v1618
        %v1761 = vadd.f32 %v1745, %v1623
        %v1762 = vadd.f32 %v1746, %v1626
        %v1763 = vadd.f32 %v1747, %v1631
        %v1764 = vadd.f32 %v1748, %v1634
        %1765 = vst [vmem:[#allocation4] sm:$0xff] %v1749
        %1766 = vst [vmem:[#allocation4 + $0x8] sm:$0xff] %v1750
        %1767 = vst [vmem:[#allocation4 + $0x10] sm:$0xff] %v1751
        %1768 = vst [vmem:[#allocation4 + $0x18] sm:$0xff] %v1752
        %1769 = vst [vmem:[#allocation4 + $0x20] sm:$0xff] %v1753
        %1770 = vst [vmem:[#allocation4 + $0x28] sm:$0xff] %v1754
        %1771 = vst [vmem:[#allocation4 + $0x30] sm:$0xff] %v1755
        %1772 = vst [vmem:[#allocation4 + $0x38] sm:$0xff] %v1756
        %1773 = vst [vmem:[#allocation4 + $0x40] sm:$0xff] %v1757
        %1774 = vst [vmem:[#allocation4 + $0x48] sm:$0xff] %v1758
        %1775 = vst [vmem:[#allocation4 + $0x50] sm:$0xff] %v1759
        %1776 = vst [vmem:[#allocation4 + $0x58] sm:$0xff] %v1760
        %1777 = vst [vmem:[#allocation4 + $0x60] sm:$0xff] %v1761
        %1778 = vst [vmem:[#allocation4 + $0x68] sm:$0xff] %v1762
        %1779 = vst [vmem:[#allocation4 + $0x70] sm:$0xff] %v1763
        %1780 = vst [vmem:[#allocation4 + $0x78] sm:$0xff] %v1764
        %1781 = vst.msk [vmem:[#allocation2] sm:$0xff] %vm1507, %v1235
        %1782 = vst.msk [vmem:[#allocation2 + $0x8] sm:$0xff] %vm1507, %v1236
        %1783 = vst.msk [vmem:[#allocation2 + $0x10] sm:$0xff] %vm1507, %v1237
        %1784 = vst.msk [vmem:[#allocation2 + $0x18] sm:$0xff] %vm1507, %v1238
        %1785 = vst.msk [vmem:[#allocation2 + $0x20] sm:$0xff] %vm1507, %v1239
        %1786 = vst.msk [vmem:[#allocation2 + $0x28] sm:$0xff] %vm1507, %v1240
        %1787 = vst.msk [vmem:[#allocation2 + $0x30] sm:$0xff] %vm1507, %v1241
        %1788 = vst.msk [vmem:[#allocation2 + $0x38] sm:$0xff] %vm1507, %v1242
        %1789 = vst.msk [vmem:[#allocation2 + $0x40] sm:$0xff] %vm1507, %v1243
        %1790 = vst.msk [vmem:[#allocation2 + $0x48] sm:$0xff] %vm1507, %v1244
        %1791 = vst.msk [vmem:[#allocation2 + $0x50] sm:$0xff] %vm1507, %v1245
        %1792 = vst.msk [vmem:[#allocation2 + $0x58] sm:$0xff] %vm1507, %v1246
        %1793 = vst.msk [vmem:[#allocation2 + $0x60] sm:$0xff] %vm1507, %v1247
        %1794 = vst.msk [vmem:[#allocation2 + $0x68] sm:$0xff] %vm1507, %v1248
        %1795 = vst.msk [vmem:[#allocation2 + $0x70] sm:$0xff] %vm1507, %v1249
        %1796 = vst.msk [vmem:[#allocation2 + $0x78] sm:$0xff] %vm1507, %v1250
        %p1797 = scmp.eq.s32.totalorder %s23, 1
        // Predicated region
        $region82: #{tpu_custom_call.1} parent=72 // pred_check
          %p1798 = pneg %p1797
        $region83: #{tpu_custom_call.1} parent=72 // pred_check_branch
          %1800 = sbr.rel (%p1798) target = $region85
        $region84: #{tpu_custom_call.1} parent=72 // pred_region
          %v1801 = vld [vmem:[#allocation3] sm:$0xff]
          %v1802 = vld [vmem:[#allocation3 + $0x8] sm:$0xff]
          %v1803 = vld [vmem:[#allocation3 + $0x10] sm:$0xff]
          %v1804 = vld [vmem:[#allocation3 + $0x18] sm:$0xff]
          %v1805 = vld [vmem:[#allocation3 + $0x20] sm:$0xff]
          %v1806 = vld [vmem:[#allocation3 + $0x28] sm:$0xff]
          %v1807 = vld [vmem:[#allocation3 + $0x30] sm:$0xff]
          %v1808 = vld [vmem:[#allocation3 + $0x38] sm:$0xff]
          %v1809 = vld [vmem:[#allocation3 + $0x40] sm:$0xff]
          %v1810 = vld [vmem:[#allocation3 + $0x48] sm:$0xff]
          %v1811 = vld [vmem:[#allocation3 + $0x50] sm:$0xff]
          %v1812 = vld [vmem:[#allocation3 + $0x58] sm:$0xff]
          %v1813 = vld [vmem:[#allocation3 + $0x60] sm:$0xff]
          %v1814 = vld [vmem:[#allocation3 + $0x68] sm:$0xff]
          %v1815 = vld [vmem:[#allocation3 + $0x70] sm:$0xff]
          %v1816 = vld [vmem:[#allocation3 + $0x78] sm:$0xff]
          %v1817 = vrcp.pop %v1801
          %v1818 = vmul.f32 1.0, %v1817
          %v1819 = vrcp.pop %v1802
          %v1820 = vmul.f32 1.0, %v1819
          %v1821 = vrcp.pop %v1803
          %v1822 = vmul.f32 1.0, %v1821
          %v1823 = vrcp.pop %v1804
          %v1824 = vmul.f32 1.0, %v1823
          %v1825 = vrcp.pop %v1805
          %v1826 = vmul.f32 1.0, %v1825
          %v1827 = vrcp.pop %v1806
          %v1828 = vmul.f32 1.0, %v1827
          %v1829 = vrcp.pop %v1807
          %v1830 = vmul.f32 1.0, %v1829
          %v1831 = vrcp.pop %v1808
          %v1832 = vmul.f32 1.0, %v1831
          %v1833 = vrcp.pop %v1809
          %v1834 = vmul.f32 1.0, %v1833
          %v1835 = vrcp.pop %v1810
          %v1836 = vmul.f32 1.0, %v1835
          %v1837 = vrcp.pop %v1811
          %v1838 = vmul.f32 1.0, %v1837
          %v1839 = vrcp.pop %v1812
          %v1840 = vmul.f32 1.0, %v1839
          %v1841 = vrcp.pop %v1813
          %v1842 = vmul.f32 1.0, %v1841
          %v1843 = vrcp.pop %v1814
          %v1844 = vmul.f32 1.0, %v1843
          %v1845 = vrcp.pop %v1815
          %v1846 = vmul.f32 1.0, %v1845
          %v1847 = vrcp.pop %v1816
          %v1848 = vmul.f32 1.0, %v1847
          %v1849 = vld [vmem:[#allocation5] sm:$0xff]
          %v1850 = vld [vmem:[#allocation5 + $0x8] sm:$0xff]
          %v1851 = vld [vmem:[#allocation5 + $0x10] sm:$0xff]
          %v1852 = vld [vmem:[#allocation5 + $0x18] sm:$0xff]
          %v1853 = vld [vmem:[#allocation5 + $0x20] sm:$0xff]
          %v1854 = vld [vmem:[#allocation5 + $0x28] sm:$0xff]
          %v1855 = vld [vmem:[#allocation5 + $0x30] sm:$0xff]
          %v1856 = vld [vmem:[#allocation5 + $0x38] sm:$0xff]
          %v1857 = vld [vmem:[#allocation5 + $0x40] sm:$0xff]
          %v1858 = vld [vmem:[#allocation5 + $0x48] sm:$0xff]
          %v1859 = vld [vmem:[#allocation5 + $0x50] sm:$0xff]
          %v1860 = vld [vmem:[#allocation5 + $0x58] sm:$0xff]
          %v1861 = vld [vmem:[#allocation5 + $0x60] sm:$0xff]
          %v1862 = vld [vmem:[#allocation5 + $0x68] sm:$0xff]
          %v1863 = vld [vmem:[#allocation5 + $0x70] sm:$0xff]
          %v1864 = vld [vmem:[#allocation5 + $0x78] sm:$0xff]
          %v1865 = vld [vmem:[#allocation4] sm:$0xff]
          %v1866 = vld [vmem:[#allocation4 + $0x8] sm:$0xff]
          %v1867 = vld [vmem:[#allocation4 + $0x10] sm:$0xff]
          %v1868 = vld [vmem:[#allocation4 + $0x18] sm:$0xff]
          %v1869 = vld [vmem:[#allocation4 + $0x20] sm:$0xff]
          %v1870 = vld [vmem:[#allocation4 + $0x28] sm:$0xff]
          %v1871 = vld [vmem:[#allocation4 + $0x30] sm:$0xff]
          %v1872 = vld [vmem:[#allocation4 + $0x38] sm:$0xff]
          %v1873 = vld [vmem:[#allocation4 + $0x40] sm:$0xff]
          %v1874 = vld [vmem:[#allocation4 + $0x48] sm:$0xff]
          %v1875 = vld [vmem:[#allocation4 + $0x50] sm:$0xff]
          %v1876 = vld [vmem:[#allocation4 + $0x58] sm:$0xff]
          %v1877 = vld [vmem:[#allocation4 + $0x60] sm:$0xff]
          %v1878 = vld [vmem:[#allocation4 + $0x68] sm:$0xff]
          %v1879 = vld [vmem:[#allocation4 + $0x70] sm:$0xff]
          %v1880 = vld [vmem:[#allocation4 + $0x78] sm:$0xff]
          %1882 = vset.pattern.permute.xlu0 0
          %1883 = vperm.xlu0 %1882, %v1818
          %v1884 = vpop.permute.xlu0 %1883
          %1887 = vset.pattern.permute.xlu0 0
          %1888 = vperm.xlu0 %1887, %v1820
          %v1889 = vpop.permute.xlu0 %1888
          %1892 = vset.pattern.permute.xlu0 0
          %1893 = vperm.xlu0 %1892, %v1822
          %v1894 = vpop.permute.xlu0 %1893
          %1897 = vset.pattern.permute.xlu0 0
          %1898 = vperm.xlu0 %1897, %v1824
          %v1899 = vpop.permute.xlu0 %1898
          %1902 = vset.pattern.permute.xlu0 0
          %1903 = vperm.xlu0 %1902, %v1826
          %v1904 = vpop.permute.xlu0 %1903
          %1907 = vset.pattern.permute.xlu0 0
          %1908 = vperm.xlu0 %1907, %v1828
          %v1909 = vpop.permute.xlu0 %1908
          %1912 = vset.pattern.permute.xlu0 0
          %1913 = vperm.xlu0 %1912, %v1830
          %v1914 = vpop.permute.xlu0 %1913
          %1917 = vset.pattern.permute.xlu0 0
          %1918 = vperm.xlu0 %1917, %v1832
          %v1919 = vpop.permute.xlu0 %1918
          %1922 = vset.pattern.permute.xlu0 0
          %1923 = vperm.xlu0 %1922, %v1834
          %v1924 = vpop.permute.xlu0 %1923
          %1927 = vset.pattern.permute.xlu0 0
          %1928 = vperm.xlu0 %1927, %v1836
          %v1929 = vpop.permute.xlu0 %1928
          %1932 = vset.pattern.permute.xlu0 0
          %1933 = vperm.xlu0 %1932, %v1838
          %v1934 = vpop.permute.xlu0 %1933
          %1937 = vset.pattern.permute.xlu0 0
          %1938 = vperm.xlu0 %1937, %v1840
          %v1939 = vpop.permute.xlu0 %1938
          %1942 = vset.pattern.permute.xlu0 0
          %1943 = vperm.xlu0 %1942, %v1842
          %v1944 = vpop.permute.xlu0 %1943
          %1947 = vset.pattern.permute.xlu0 0
          %1948 = vperm.xlu0 %1947, %v1844
          %v1949 = vpop.permute.xlu0 %1948
          %1952 = vset.pattern.permute.xlu0 0
          %1953 = vperm.xlu0 %1952, %v1846
          %v1954 = vpop.permute.xlu0 %1953
          %1957 = vset.pattern.permute.xlu0 0
          %1958 = vperm.xlu0 %1957, %v1848
          %v1959 = vpop.permute.xlu0 %1958
          %v1961 = vmul.f32 %v1865, %v1884
          %v1962 = vmul.f32 %v1866, %v1889
          %v1963 = vmul.f32 %v1867, %v1894
          %v1964 = vmul.f32 %v1868, %v1899
          %v1965 = vmul.f32 %v1869, %v1904
          %v1966 = vmul.f32 %v1870, %v1909
          %v1967 = vmul.f32 %v1871, %v1914
          %v1968 = vmul.f32 %v1872, %v1919
          %v1969 = vmul.f32 %v1873, %v1924
          %v1970 = vmul.f32 %v1874, %v1929
          %v1971 = vmul.f32 %v1875, %v1934
          %v1972 = vmul.f32 %v1876, %v1939
          %v1973 = vmul.f32 %v1877, %v1944
          %v1974 = vmul.f32 %v1878, %v1949
          %v1975 = vmul.f32 %v1879, %v1954
          %v1976 = vmul.f32 %v1880, %v1959
          %v1977 = vsub.f32 %v1849, %v1961
          %v1978 = vsub.f32 %v1850, %v1962
          %v1979 = vsub.f32 %v1851, %v1963
          %v1980 = vsub.f32 %v1852, %v1964
          %v1981 = vsub.f32 %v1853, %v1965
          %v1982 = vsub.f32 %v1854, %v1966
          %v1983 = vsub.f32 %v1855, %v1967
          %v1984 = vsub.f32 %v1856, %v1968
          %v1985 = vsub.f32 %v1857, %v1969
          %v1986 = vsub.f32 %v1858, %v1970
          %v1987 = vsub.f32 %v1859, %v1971
          %v1988 = vsub.f32 %v1860, %v1972
          %v1989 = vsub.f32 %v1861, %v1973
          %v1990 = vsub.f32 %v1862, %v1974
          %v1991 = vsub.f32 %v1863, %v1975
          %v1992 = vsub.f32 %v1864, %v1976
          %v1993 = vmax.f32 %v1977, 0.0
          %v1994 = vmax.f32 %v1978, 0.0
          %v1995 = vmax.f32 %v1979, 0.0
          %v1996 = vmax.f32 %v1980, 0.0
          %v1997 = vmax.f32 %v1981, 0.0
          %v1998 = vmax.f32 %v1982, 0.0
          %v1999 = vmax.f32 %v1983, 0.0
          %v2000 = vmax.f32 %v1984, 0.0
          %v2001 = vmax.f32 %v1985, 0.0
          %v2002 = vmax.f32 %v1986, 0.0
          %v2003 = vmax.f32 %v1987, 0.0
          %v2004 = vmax.f32 %v1988, 0.0
          %v2005 = vmax.f32 %v1989, 0.0
          %v2006 = vmax.f32 %v1990, 0.0
          %v2007 = vmax.f32 %v1991, 0.0
          %v2008 = vmax.f32 %v1992, 0.0
          %2009 = vst [vmem:[%s315] sm:$0xff] %v1993
          %2010 = vst [vmem:[%s315 + $0x8] sm:$0xff] %v1994
          %2011 = vst [vmem:[%s315 + $0x10] sm:$0xff] %v1995
          %2012 = vst [vmem:[%s315 + $0x18] sm:$0xff] %v1996
          %2013 = vst [vmem:[%s315 + $0x20] sm:$0xff] %v1997
          %2014 = vst [vmem:[%s315 + $0x28] sm:$0xff] %v1998
          %2015 = vst [vmem:[%s315 + $0x30] sm:$0xff] %v1999
          %2016 = vst [vmem:[%s315 + $0x38] sm:$0xff] %v2000
          %2017 = vst [vmem:[%s315 + $0x40] sm:$0xff] %v2001
          %2018 = vst [vmem:[%s315 + $0x48] sm:$0xff] %v2002
          %2019 = vst [vmem:[%s315 + $0x50] sm:$0xff] %v2003
          %2020 = vst [vmem:[%s315 + $0x58] sm:$0xff] %v2004
          %2021 = vst [vmem:[%s315 + $0x60] sm:$0xff] %v2005
          %2022 = vst [vmem:[%s315 + $0x68] sm:$0xff] %v2006
          %2023 = vst [vmem:[%s315 + $0x70] sm:$0xff] %v2007
          %2024 = vst [vmem:[%s315 + $0x78] sm:$0xff] %v2008
        $region85: #{tpu_custom_call.1} parent=72 // pred_fallthru
          _
        %s2025 = sand.u32 %s129, 1
        %s2026 = scalar_lea.sflag [#allocation8], %s2025
        %s2027 = sand.u32 %s129, 1
        %s2028 = smul.addr %s2027, 128
        %s2029 = scalar_lea.vmem [#allocation7], %s2028
        // Predicated region
        $region86: #{tpu_custom_call.1} parent=72 // pred_check
          %p2030 = pneg %p139
        $region87: #{tpu_custom_call.1} parent=72 // pred_check_branch
          %2032 = sbr.rel (%p2030) target = $region89
        $region88: #{tpu_custom_call.1} parent=72 // pred_region
          %s2033 = smul.u32 16, %s22
          %s2035 = ssub.s32 2048, 2048
          %2036 = vsyncadd %s2026, %s2035
          %s2037 = smul.addr %s2033, 128
          %s2038 = scalar_lea.hbm %s4, %s2037
          %s2039 = sshll.u32 %s2029, 4
          %s2040 = int_to_ptr.vmem [resolvable:$true] %s2039
          %2045 = dma.vmem_to_hbm [thread:$0]  %s2040, 2048, %s2038, %s2026, 128, 128, 8
        $region89: #{tpu_custom_call.1} parent=72 // pred_fallthru
          _
      $region73: #{tpu_custom_call.1} parent=5 // pred_fallthru
        _
      %p2046 = scmp.le.s32.totalorder 2, %s13
      // Predicated region
      $region90: #{tpu_custom_call.1} parent=5 // pred_check
        %p2047 = pneg %p2046
      $region91: #{tpu_custom_call.1} parent=5 // pred_check_branch
        %2049 = sbr.rel (%p2047) target = $region93
      $region92: #{tpu_custom_call.1} parent=5 // pred_region
        %s2050 = ssub.s32 %s13, 2
        // Predicated region
        $region94: #{tpu_custom_call.1} parent=92 // pred_check
          %p2051 = pneg %p145
        $region95: #{tpu_custom_call.1} parent=92 // pred_check_branch
          %2053 = sbr.rel (%p2051) target = $region97
        $region96: #{tpu_custom_call.1} parent=92 // pred_region
          %s2054 = sand.u32 %s130, 1
          %s2055 = scalar_lea.sflag [#allocation8], %s2054
          %s2056 = sand.u32 %s130, 1
          %s2057 = smul.addr %s2056, 128
          %s2058 = scalar_lea.vmem [#allocation7], %s2057
          %2059 = dma.done %s2055, 2048
        $region97: #{tpu_custom_call.1} parent=92 // pred_fallthru
          _
      $region93: #{tpu_custom_call.1} parent=5 // pred_fallthru
        _
    $region6: #{tpu_custom_call.1} parent=1 // loop_footer
      %s17 = sadd.s32 1, %s13
    $region7: #{tpu_custom_call.1} parent=1 // loop_footer_branch
      %12 = sbr.rel target = $region3
    $region8: #{tpu_custom_call.1} parent=1 // loop_exit
      _
    %2060 = vsyncpa [#allocation8], 1
    %s2061 = scalar_lea.sflag [#allocation8], 1
    %2062 = vsyncpa %s2061, 1

</llo_original>
